<compile_context>
chip_gen: v7x
topology: tpu7x:2x2x1
jax: 0.10.0
libtpu: 0.0.40
codegen_flags: <defaults>
</compile_context>

<pallas_src>
import functools

import jax
import jax.numpy as jnp
from jax.experimental import pallas as pl
from jax.experimental.pallas import tpu as pltpu


def _layernorm(x, g, b, eps):
    mu = jnp.mean(x, axis=-1, keepdims=True)
    var = jnp.mean((x - mu) ** 2, axis=-1, keepdims=True)
    return (x - mu) * jax.lax.rsqrt(var + eps) * g + b


def _swap_leading(t):
    """(A, B, D) -> (B, A, D), preferring the TPU-native einshape when available."""
    if hasattr(pltpu, "einshape"):
        return pltpu.einshape("abd->bad", t)
    return jnp.swapaxes(t, 0, 1)


def _transformer_kernel(x_ref, ln1_g_ref, ln1_b_ref, wq_ref, wk_ref, wv_ref,
                        wp_ref, bp_ref, ln2_g_ref, ln2_b_ref,
                        w1_ref, b1_ref, w2_ref, b2_ref, o_ref,
                        *, num_heads, eps, block_b, seq_len, mxu_dtype):
    f32 = jnp.float32
    x = x_ref[...].astype(f32)                       # (R, C), R = block_b * seq_len
    r, c = x.shape
    hd = c // num_heads
    scale = float(hd) ** -0.5

    def mx(a):                                       # MXU-operand dtype (bf16 default)
        return a if mxu_dtype is None else a.astype(mxu_dtype)

    # ---- LayerNorm 1 (f32 math, torch eps placement) ----
    xn = _layernorm(x, ln1_g_ref[...].astype(f32), ln1_b_ref[...].astype(f32), eps)
    xnm = mx(xn)

    # ---- q / k / v projections (bias=False); fold 1/sqrt(hd) into q ----
    q = jnp.dot(xnm, wq_ref[...], preferred_element_type=f32) * scale
    k = jnp.dot(xnm, wk_ref[...], preferred_element_type=f32)
    v = jnp.dot(xnm, wv_ref[...], preferred_element_type=f32)

    g = num_heads * block_b

    def to_heads(t):                                 # (R, C) -> (H*block_b, N, hd)
        t = t.reshape(r, num_heads, hd)
        t = _swap_leading(t)                         # (H, R, hd)
        return t.reshape(g, seq_len, hd)             # per-(head, sequence) groups

    # TODO(synk): at large C the (R,H,hd)<->(H,R,hd) relayouts could be removed by
    # pre-splitting Wq/Wk/Wv per head and emitting a head-batched matmul; the fused
    # matmul + einshape form below is kept because it lowers reliably on Mosaic.
    q3, k3, v3 = to_heads(q), to_heads(k), to_heads(v)

    # TODO(synk): key-tile this with an online-softmax accumulator before scaling N;
    # at these shapes the (G, N, N) score tensor comfortably fits VMEM.
    s = jnp.einsum("gqd,gkd->gqk", mx(q3), mx(k3),
                   preferred_element_type=f32)       # (G, N, N) scores
    s = s - jnp.max(s, axis=-1, keepdims=True)       # softmax over the key axis
    p = jnp.exp(s)                                   # f32
    denom = jnp.sum(p, axis=-1, keepdims=True)       # (G, N, 1), f32
    o3 = jnp.einsum("gqk,gkd->gqd", mx(p), mx(v3),
                    preferred_element_type=f32)      # (G, N, hd), un-normalized
    # Deferred normalization: O(G*N*hd) VPU multiplies instead of O(G*N^2); the
    # approximate reciprocal lands on the otherwise idle EUP slot.
    o3 = o3 * pl.reciprocal(denom, approx=True)
    attn = _swap_leading(o3.reshape(num_heads, r, hd)).reshape(r, c)

    # ---- output projection (bias=True) + first residual ----
    attn = jnp.dot(mx(attn), wp_ref[...], preferred_element_type=f32) \
        + bp_ref[...].astype(f32)
    x1 = x + attn

    # ---- LayerNorm 2 + MLP (fc1 -> relu -> fc2; dropout=0.0 is identity) ----
    xn2 = _layernorm(x1, ln2_g_ref[...].astype(f32), ln2_b_ref[...].astype(f32), eps)
    h1 = jnp.dot(mx(xn2), w1_ref[...], preferred_element_type=f32) + b1_ref[...].astype(f32)
    h1 = jnp.maximum(h1, 0.0)
    h2 = jnp.dot(mx(h1), w2_ref[...], preferred_element_type=f32) + b2_ref[...].astype(f32)

    o_ref[...] = (x1 + h2).astype(o_ref.dtype)       # second residual


def _usable_vmem_bytes():
    """Per-generation VMEM budget: capacity minus 16 MiB headroom.

    v5e/v6e (128 MiB) -> ~112 MiB; v7x (64 MiB per TC) -> ~48 MiB.
    """
    try:
        cap = int(pltpu.get_tpu_info().vmem_capacity_bytes)
    except Exception:  # hardware-capacity query only; numerics unaffected
        cap = 64 << 20
    return max(cap - (16 << 20), 32 << 20)


def transformer_layer(x, params, *, num_heads, eps=1e-5, block_b=None,
                      mxu_dtype=jnp.bfloat16):
    B, N, C = x.shape
    hidden = params["w1"].shape[1]
    assert C % num_heads == 0

    # Split the fused to_keys_values weight in the wrapper (keys = first C cols,
    # values = last C cols) so the kernel never lane-slices the (R, 2C) kv matrix.
    wk = params["wkv"][:, :C]
    wv = params["wkv"][:, C:]

    def cast_w(w):
        return w if mxu_dtype is None else w.astype(mxu_dtype)

    weights = dict(wq=cast_w(params["wq"]), wk=cast_w(wk), wv=cast_w(wv),
                   wp=cast_w(params["wp"]), w1=cast_w(params["w1"]),
                   w2=cast_w(params["w2"]))
    small = [params[k] for k in ("ln1_g", "ln1_b", "bp", "ln2_g", "ln2_b", "b1", "b2")]

    usable_vmem = _usable_vmem_bytes()
    # Resident weights are double-buffered by Pallas even with constant index_maps.
    resident = 2 * (sum(int(w.size) * w.dtype.itemsize for w in weights.values())
                    + sum(int(p.size) * p.dtype.itemsize for p in small))
    tile_budget = usable_vmem - resident - (4 << 20)   # safety margin

    def tile_vmem_bytes(bblk):
        rows = bblk * N
        act = rows * C * 4 * 10                        # x, xn, q/k/v (+casts), heads, x1
        mlp = rows * hidden * 4 * 3                    # fc1 intermediate (+cast)
        scores = num_heads * bblk * N * N * 4 * 2      # s and p
        io = 2 * 2 * rows * C * x.dtype.itemsize       # double-buffered in/out tiles
        return act + mlp + scores + io

    if block_b is None:
        # Divisors of B giving sublane-aligned row tiles; keep grid >= 2 whenever
        # possible so the "parallel" batch axis shards across v7x's two TensorCores.
        cands = [d for d in range(1, B + 1)
                 if B % d == 0 and (d == B or (d * N) % 8 == 0)]
        multi = [d for d in cands if (B // d) >= 2]
        pool = multi if multi else cands
        fit = [d for d in pool if tile_vmem_bytes(d) <= tile_budget]
        block_b = max(fit) if fit else min(pool)

    rows = block_b * N
    kernel = functools.partial(
        _transformer_kernel, num_heads=num_heads, eps=eps, block_b=block_b,
        seq_len=N, mxu_dtype=mxu_dtype)

    def whole(a):                                      # weight resident every step
        return pl.BlockSpec(a.shape, lambda i: (0,) * a.ndim)

    in_specs = [
        pl.BlockSpec((rows, C), lambda i: (i, 0)),     # activations
        whole(params["ln1_g"]), whole(params["ln1_b"]),
        whole(weights["wq"]), whole(weights["wk"]), whole(weights["wv"]),
        whole(weights["wp"]), whole(params["bp"]),
        whole(params["ln2_g"]), whole(params["ln2_b"]),
        whole(weights["w1"]), whole(params["b1"]),
        whole(weights["w2"]), whole(params["b2"]),
    ]

    x2 = x.reshape(B * N, C)                           # fuse batch into the row dim
    out2 = pl.pallas_call(
        kernel,
        out_shape=jax.ShapeDtypeStruct((B * N, C), x.dtype),
        grid_spec=pltpu.PrefetchScalarGridSpec(
            num_scalar_prefetch=0,
            grid=(B // block_b,),
            in_specs=in_specs,
            out_specs=pl.BlockSpec((rows, C), lambda i: (i, 0)),
        ),
        compiler_params=pltpu.CompilerParams(
            dimension_semantics=("parallel",),
            vmem_limit_bytes=int(usable_vmem)),
    )(x2, params["ln1_g"], params["ln1_b"], weights["wq"], weights["wk"],
      weights["wv"], weights["wp"], params["bp"], params["ln2_g"],
      params["ln2_b"], weights["w1"], params["b1"], weights["w2"], params["b2"])
    return out2.reshape(B, N, C)


def ref_transformer_layer(x, params, *, num_heads, eps=1e-5):
    """Pure-JAX reference mirroring the PyTorch forward exactly (f32)."""
    B, N, C = x.shape
    hd = C // num_heads
    scale = hd ** -0.5

    def ln(v, g, b):
        mu = jnp.mean(v, axis=-1, keepdims=True)
        var = jnp.mean((v - mu) ** 2, axis=-1, keepdims=True)
        return (v - mu) / jnp.sqrt(var + eps) * g + b

    xn = ln(x, params["ln1_g"], params["ln1_b"])
    q = (xn @ params["wq"]).reshape(B, N, num_heads, hd)
    kv = xn @ params["wkv"]
    k = kv[..., :C].reshape(B, N, num_heads, hd)
    v = kv[..., C:].reshape(B, N, num_heads, hd)
    att = jnp.einsum("bnhd,bmhd->bnmh", q, k) * scale
    att = jax.nn.softmax(att, axis=2)
    out = jnp.einsum("bnmh,bmhd->bnhd", att, v).reshape(B, N, C)
    out = out @ params["wp"] + params["bp"]
    x1 = x + out
    xn2 = ln(x1, params["ln2_g"], params["ln2_b"])
    h = jnp.maximum(xn2 @ params["w1"] + params["b1"], 0.0)
    return x1 + h @ params["w2"] + params["b2"]


if __name__ == "__main__":
    # TransformerLayer(dim_self=32, dim_ref=32, num_heads=4, mlp_ratio=4.0, bias=False)
    # NOTE: this is a tiny correctness shape; tune block_b / benchmark at realistic
    # sizes (C >= 512, N >= 128) where the structural optimizations matter.
    B, N, C, H = 2, 8, 32, 4
    HIDDEN = int(C * 4.0)

    key = jax.random.PRNGKey(0)
    ks = jax.random.split(key, 8)
    scale = 0.02
    params = {
        "ln1_g": jnp.ones((1, C), jnp.float32),
        "ln1_b": jnp.zeros((1, C), jnp.float32),
        "wq":  scale * jax.random.normal(ks[0], (C, C), jnp.float32),       # (in, out)
        "wkv": scale * jax.random.normal(ks[1], (C, 2 * C), jnp.float32),
        "wp":  scale * jax.random.normal(ks[2], (C, C), jnp.float32),
        "bp":  scale * jax.random.normal(ks[3], (1, C), jnp.float32),
        "ln2_g": jnp.ones((1, C), jnp.float32),
        "ln2_b": jnp.zeros((1, C), jnp.float32),
        "w1": scale * jax.random.normal(ks[4], (C, HIDDEN), jnp.float32),
        "b1": scale * jax.random.normal(ks[5], (1, HIDDEN), jnp.float32),
        "w2": scale * jax.random.normal(ks[6], (HIDDEN, C), jnp.float32),
        "b2": scale * jax.random.normal(ks[7], (1, C), jnp.float32),
    }
    x = jax.random.normal(jax.random.PRNGKey(1), (B, N, C), jnp.float32)

    out = transformer_layer(x, params, num_heads=H)   # bf16 MXU operands, f32 accum
    out = jax.block_until_ready(out)

    ref = ref_transformer_layer(x, params, num_heads=H)
    assert out.shape == (B, N, C)
    err = float(jnp.max(jnp.abs(out - ref)))
    # Tolerance loosened vs. the f32 path to cover bf16 MXU operands + approx recip.
    assert jnp.allclose(out, ref, atol=2e-2, rtol=2e-2), f"mismatch vs reference: {err}"
    print("KERNEL_OK")
</pallas_src>

<mosaic_0001>
module attributes {stable_mosaic.version = 11 : i64} {
  func.func @_transformer_kernel(%arg0: i32, %arg1: memref<8x32xf32, #tpu.memory_space<vmem>>, %arg2: memref<1x32xf32, #tpu.memory_space<vmem>>, %arg3: memref<1x32xf32, #tpu.memory_space<vmem>>, %arg4: memref<32x32xbf16, #tpu.memory_space<vmem>>, %arg5: memref<32x32xbf16, #tpu.memory_space<vmem>>, %arg6: memref<32x32xbf16, #tpu.memory_space<vmem>>, %arg7: memref<32x32xbf16, #tpu.memory_space<vmem>>, %arg8: memref<1x32xf32, #tpu.memory_space<vmem>>, %arg9: memref<1x32xf32, #tpu.memory_space<vmem>>, %arg10: memref<1x32xf32, #tpu.memory_space<vmem>>, %arg11: memref<32x128xbf16, #tpu.memory_space<vmem>>, %arg12: memref<1x128xf32, #tpu.memory_space<vmem>>, %arg13: memref<128x32xbf16, #tpu.memory_space<vmem>>, %arg14: memref<1x32xf32, #tpu.memory_space<vmem>>, %arg15: memref<8x32xf32, #tpu.memory_space<vmem>>) attributes {dimension_semantics = [#tpu.dimension_semantics<parallel>], iteration_bounds = array<i64: 2>, scalar_prefetch = 0 : i64, scratch_operands = 0 : i64, tpu.core_type = #tpu.core_type<tc>, window_params = [{transform_indices = @transform_0, window_bounds = array<i64: 8, 32>}, {pipeline_mode = #tpu.pipeline_mode<synchronous>, transform_indices = @transform_1, window_bounds = array<i64: 1, 32>}, {pipeline_mode = #tpu.pipeline_mode<synchronous>, transform_indices = @transform_2, window_bounds = array<i64: 1, 32>}, {pipeline_mode = #tpu.pipeline_mode<synchronous>, transform_indices = @transform_3, window_bounds = array<i64: 32, 32>}, {pipeline_mode = #tpu.pipeline_mode<synchronous>, transform_indices = @transform_4, window_bounds = array<i64: 32, 32>}, {pipeline_mode = #tpu.pipeline_mode<synchronous>, transform_indices = @transform_5, window_bounds = array<i64: 32, 32>}, {pipeline_mode = #tpu.pipeline_mode<synchronous>, transform_indices = @transform_6, window_bounds = array<i64: 32, 32>}, {pipeline_mode = #tpu.pipeline_mode<synchronous>, transform_indices = @transform_7, window_bounds = array<i64: 1, 32>}, {pipeline_mode = #tpu.pipeline_mode<synchronous>, transform_indices = @transform_8, window_bounds = array<i64: 1, 32>}, {pipeline_mode = #tpu.pipeline_mode<synchronous>, transform_indices = @transform_9, window_bounds = array<i64: 1, 32>}, {pipeline_mode = #tpu.pipeline_mode<synchronous>, transform_indices = @transform_10, window_bounds = array<i64: 32, 128>}, {pipeline_mode = #tpu.pipeline_mode<synchronous>, transform_indices = @transform_11, window_bounds = array<i64: 1, 128>}, {pipeline_mode = #tpu.pipeline_mode<synchronous>, transform_indices = @transform_12, window_bounds = array<i64: 128, 32>}, {pipeline_mode = #tpu.pipeline_mode<synchronous>, transform_indices = @transform_13, window_bounds = array<i64: 1, 32>}, {transform_indices = @transform_14, window_bounds = array<i64: 8, 32>}]} {
    %c0 = arith.constant 0 : index
    %c0_0 = arith.constant 0 : index
    %0 = vector.load %arg1[%c0, %c0_0] : memref<8x32xf32, #tpu.memory_space<vmem>>, vector<8x32xf32>
    %c0_1 = arith.constant 0 : index
    %c0_2 = arith.constant 0 : index
    %1 = vector.load %arg2[%c0_1, %c0_2] : memref<1x32xf32, #tpu.memory_space<vmem>>, vector<1x32xf32>
    %c0_3 = arith.constant 0 : index
    %c0_4 = arith.constant 0 : index
    %2 = vector.load %arg3[%c0_3, %c0_4] : memref<1x32xf32, #tpu.memory_space<vmem>>, vector<1x32xf32>
    %cst = arith.constant dense<0.000000e+00> : vector<8xf32>
    %3 = vector.multi_reduction <add>, %0, %cst [1] : vector<8x32xf32> to vector<8xf32>
    %4 = vector.shape_cast %3 : vector<8xf32> to vector<8x1xf32>
    %cst_5 = arith.constant 3.200000e+01 : f32
    %5 = vector.broadcast %cst_5 : f32 to vector<8x1xf32>
    %6 = arith.divf %4, %5 : vector<8x1xf32>
    %7 = vector.broadcast %6 : vector<8x1xf32> to vector<8x32xf32>
    %8 = arith.subf %0, %7 : vector<8x32xf32>
    %9 = arith.mulf %8, %8 : vector<8x32xf32>
    %cst_6 = arith.constant dense<0.000000e+00> : vector<8xf32>
    %10 = vector.multi_reduction <add>, %9, %cst_6 [1] : vector<8x32xf32> to vector<8xf32>
    %11 = vector.shape_cast %10 : vector<8xf32> to vector<8x1xf32>
    %cst_7 = arith.constant 3.200000e+01 : f32
    %12 = vector.broadcast %cst_7 : f32 to vector<8x1xf32>
    %13 = arith.divf %11, %12 : vector<8x1xf32>
    %14 = vector.broadcast %6 : vector<8x1xf32> to vector<8x32xf32>
    %15 = arith.subf %0, %14 : vector<8x32xf32>
    %cst_8 = arith.constant 9.99999974E-6 : f32
    %16 = vector.broadcast %cst_8 : f32 to vector<8x1xf32>
    %17 = arith.addf %13, %16 : vector<8x1xf32>
    %18 = math.rsqrt %17 : vector<8x1xf32>
    %19 = vector.broadcast %18 : vector<8x1xf32> to vector<8x32xf32>
    %20 = arith.mulf %15, %19 : vector<8x32xf32>
    %21 = vector.broadcast %1 : vector<1x32xf32> to vector<8x32xf32>
    %22 = arith.mulf %20, %21 : vector<8x32xf32>
    %23 = vector.broadcast %2 : vector<1x32xf32> to vector<8x32xf32>
    %24 = arith.addf %22, %23 : vector<8x32xf32>
    %25 = arith.truncf %24 : vector<8x32xf32> to vector<8x32xbf16>
    %c0_9 = arith.constant 0 : index
    %c0_10 = arith.constant 0 : index
    %26 = vector.load %arg4[%c0_9, %c0_10] : memref<32x32xbf16, #tpu.memory_space<vmem>>, vector<32x32xbf16>
    %cst_11 = arith.constant dense<0.000000e+00> : vector<8x32xf32>
    %27 = tpu.matmul %25, %26, %cst_11 {dimension_numbers = #tpu.dot_dimension_numbers<[1], [0], [0], [1], [0, 0, 1, 1], [], []>} : vector<8x32xbf16>, vector<32x32xbf16>, vector<8x32xf32> -> vector<8x32xf32>
    %cst_12 = arith.constant 0.353553385 : f32
    %28 = vector.broadcast %cst_12 : f32 to vector<8x32xf32>
    %29 = arith.mulf %27, %28 : vector<8x32xf32>
    %c0_13 = arith.constant 0 : index
    %c0_14 = arith.constant 0 : index
    %30 = vector.load %arg5[%c0_13, %c0_14] : memref<32x32xbf16, #tpu.memory_space<vmem>>, vector<32x32xbf16>
    %cst_15 = arith.constant dense<0.000000e+00> : vector<8x32xf32>
    %31 = tpu.matmul %25, %30, %cst_15 {dimension_numbers = #tpu.dot_dimension_numbers<[1], [0], [0], [1], [0, 0, 1, 1], [], []>} : vector<8x32xbf16>, vector<32x32xbf16>, vector<8x32xf32> -> vector<8x32xf32>
    %c0_16 = arith.constant 0 : index
    %c0_17 = arith.constant 0 : index
    %32 = vector.load %arg6[%c0_16, %c0_17] : memref<32x32xbf16, #tpu.memory_space<vmem>>, vector<32x32xbf16>
    %cst_18 = arith.constant dense<0.000000e+00> : vector<8x32xf32>
    %33 = tpu.matmul %25, %32, %cst_18 {dimension_numbers = #tpu.dot_dimension_numbers<[1], [0], [0], [1], [0, 0, 1, 1], [], []>} : vector<8x32xbf16>, vector<32x32xbf16>, vector<8x32xf32> -> vector<8x32xf32>
    %34 = vector.shape_cast %29 : vector<8x32xf32> to vector<8x4x8xf32>
    %35 = tpu.transpose %34, [1, 0, 2] : vector<8x4x8xf32> -> vector<4x8x8xf32>
    %36 = vector.shape_cast %31 : vector<8x32xf32> to vector<8x4x8xf32>
    %37 = tpu.transpose %36, [1, 0, 2] : vector<8x4x8xf32> -> vector<4x8x8xf32>
    %38 = vector.shape_cast %33 : vector<8x32xf32> to vector<8x4x8xf32>
    %39 = tpu.transpose %38, [1, 0, 2] : vector<8x4x8xf32> -> vector<4x8x8xf32>
    %40 = arith.truncf %35 : vector<4x8x8xf32> to vector<4x8x8xbf16>
    %41 = arith.truncf %37 : vector<4x8x8xf32> to vector<4x8x8xbf16>
    "tpu.trace_start"() <{level = 10 : i32, message = "gqd,gkd->gqk"}> : () -> ()
    %cst_19 = arith.constant dense<0.000000e+00> : vector<4x8x8xf32>
    %42 = tpu.matmul %40, %41, %cst_19 {dimension_numbers = #tpu.dot_dimension_numbers<[2], [2], [1], [1], [0, 0, 0, 1, 1, 1], [0], [0]>} : vector<4x8x8xbf16>, vector<4x8x8xbf16>, vector<4x8x8xf32> -> vector<4x8x8xf32>
    "tpu.trace_stop"() : () -> ()
    %cst_20 = arith.constant dense<0xFF800000> : vector<4x8xf32>
    %43 = vector.multi_reduction <maximumf>, %42, %cst_20 [2] : vector<4x8x8xf32> to vector<4x8xf32>
    %44 = vector.shape_cast %43 : vector<4x8xf32> to vector<4x8x1xf32>
    %45 = vector.broadcast %44 : vector<4x8x1xf32> to vector<4x8x8xf32>
    %46 = arith.subf %42, %45 : vector<4x8x8xf32>
    %47 = math.exp %46 : vector<4x8x8xf32>
    %cst_21 = arith.constant dense<0.000000e+00> : vector<4x8xf32>
    %48 = vector.multi_reduction <add>, %47, %cst_21 [2] : vector<4x8x8xf32> to vector<4x8xf32>
    %49 = vector.shape_cast %48 : vector<4x8xf32> to vector<4x8x1xf32>
    %50 = arith.truncf %47 : vector<4x8x8xf32> to vector<4x8x8xbf16>
    %51 = arith.truncf %39 : vector<4x8x8xf32> to vector<4x8x8xbf16>
    "tpu.trace_start"() <{level = 10 : i32, message = "gqk,gkd->gqd"}> : () -> ()
    %cst_22 = arith.constant dense<0.000000e+00> : vector<4x8x8xf32>
    %52 = tpu.matmul %50, %51, %cst_22 {dimension_numbers = #tpu.dot_dimension_numbers<[2], [1], [1], [2], [0, 0, 0, 1, 1, 2], [0], [0]>} : vector<4x8x8xbf16>, vector<4x8x8xbf16>, vector<4x8x8xf32> -> vector<4x8x8xf32>
    "tpu.trace_stop"() : () -> ()
    %53 = tpu.reciprocal %49 {approx = true} : vector<4x8x1xf32> -> vector<4x8x1xf32>
    %54 = vector.broadcast %53 : vector<4x8x1xf32> to vector<4x8x8xf32>
    %55 = arith.mulf %52, %54 : vector<4x8x8xf32>
    %56 = tpu.transpose %55, [1, 0, 2] : vector<4x8x8xf32> -> vector<8x4x8xf32>
    %57 = vector.shape_cast %56 : vector<8x4x8xf32> to vector<8x32xf32>
    %58 = arith.truncf %57 : vector<8x32xf32> to vector<8x32xbf16>
    %c0_23 = arith.constant 0 : index
    %c0_24 = arith.constant 0 : index
    %59 = vector.load %arg7[%c0_23, %c0_24] : memref<32x32xbf16, #tpu.memory_space<vmem>>, vector<32x32xbf16>
    %cst_25 = arith.constant dense<0.000000e+00> : vector<8x32xf32>
    %60 = tpu.matmul %58, %59, %cst_25 {dimension_numbers = #tpu.dot_dimension_numbers<[1], [0], [0], [1], [0, 0, 1, 1], [], []>} : vector<8x32xbf16>, vector<32x32xbf16>, vector<8x32xf32> -> vector<8x32xf32>
    %c0_26 = arith.constant 0 : index
    %c0_27 = arith.constant 0 : index
    %61 = vector.load %arg8[%c0_26, %c0_27] : memref<1x32xf32, #tpu.memory_space<vmem>>, vector<1x32xf32>
    %62 = vector.broadcast %61 : vector<1x32xf32> to vector<8x32xf32>
    %63 = arith.addf %60, %62 : vector<8x32xf32>
    %64 = arith.addf %0, %63 : vector<8x32xf32>
    %c0_28 = arith.constant 0 : index
    %c0_29 = arith.constant 0 : index
    %65 = vector.load %arg9[%c0_28, %c0_29] : memref<1x32xf32, #tpu.memory_space<vmem>>, vector<1x32xf32>
    %c0_30 = arith.constant 0 : index
    %c0_31 = arith.constant 0 : index
    %66 = vector.load %arg10[%c0_30, %c0_31] : memref<1x32xf32, #tpu.memory_space<vmem>>, vector<1x32xf32>
    %cst_32 = arith.constant dense<0.000000e+00> : vector<8xf32>
    %67 = vector.multi_reduction <add>, %64, %cst_32 [1] : vector<8x32xf32> to vector<8xf32>
    %68 = vector.shape_cast %67 : vector<8xf32> to vector<8x1xf32>
    %cst_33 = arith.constant 3.200000e+01 : f32
    %69 = vector.broadcast %cst_33 : f32 to vector<8x1xf32>
    %70 = arith.divf %68, %69 : vector<8x1xf32>
    %71 = vector.broadcast %70 : vector<8x1xf32> to vector<8x32xf32>
    %72 = arith.subf %64, %71 : vector<8x32xf32>
    %73 = arith.mulf %72, %72 : vector<8x32xf32>
    %cst_34 = arith.constant dense<0.000000e+00> : vector<8xf32>
    %74 = vector.multi_reduction <add>, %73, %cst_34 [1] : vector<8x32xf32> to vector<8xf32>
    %75 = vector.shape_cast %74 : vector<8xf32> to vector<8x1xf32>
    %cst_35 = arith.constant 3.200000e+01 : f32
    %76 = vector.broadcast %cst_35 : f32 to vector<8x1xf32>
    %77 = arith.divf %75, %76 : vector<8x1xf32>
    %78 = vector.broadcast %70 : vector<8x1xf32> to vector<8x32xf32>
    %79 = arith.subf %64, %78 : vector<8x32xf32>
    %cst_36 = arith.constant 9.99999974E-6 : f32
    %80 = vector.broadcast %cst_36 : f32 to vector<8x1xf32>
    %81 = arith.addf %77, %80 : vector<8x1xf32>
    %82 = math.rsqrt %81 : vector<8x1xf32>
    %83 = vector.broadcast %82 : vector<8x1xf32> to vector<8x32xf32>
    %84 = arith.mulf %79, %83 : vector<8x32xf32>
    %85 = vector.broadcast %65 : vector<1x32xf32> to vector<8x32xf32>
    %86 = arith.mulf %84, %85 : vector<8x32xf32>
    %87 = vector.broadcast %66 : vector<1x32xf32> to vector<8x32xf32>
    %88 = arith.addf %86, %87 : vector<8x32xf32>
    %89 = arith.truncf %88 : vector<8x32xf32> to vector<8x32xbf16>
    %c0_37 = arith.constant 0 : index
    %c0_38 = arith.constant 0 : index
    %90 = vector.load %arg11[%c0_37, %c0_38] : memref<32x128xbf16, #tpu.memory_space<vmem>>, vector<32x128xbf16>
    %cst_39 = arith.constant dense<0.000000e+00> : vector<8x128xf32>
    %91 = tpu.matmul %89, %90, %cst_39 {dimension_numbers = #tpu.dot_dimension_numbers<[1], [0], [0], [1], [0, 0, 1, 1], [], []>} : vector<8x32xbf16>, vector<32x128xbf16>, vector<8x128xf32> -> vector<8x128xf32>
    %c0_40 = arith.constant 0 : index
    %c0_41 = arith.constant 0 : index
    %92 = vector.load %arg12[%c0_40, %c0_41] : memref<1x128xf32, #tpu.memory_space<vmem>>, vector<1x128xf32>
    %93 = vector.broadcast %92 : vector<1x128xf32> to vector<8x128xf32>
    %94 = arith.addf %91, %93 : vector<8x128xf32>
    %cst_42 = arith.constant 0.000000e+00 : f32
    %95 = vector.broadcast %cst_42 : f32 to vector<8x128xf32>
    %96 = arith.maximumf %94, %95 : vector<8x128xf32>
    %97 = arith.truncf %96 : vector<8x128xf32> to vector<8x128xbf16>
    %c0_43 = arith.constant 0 : index
    %c0_44 = arith.constant 0 : index
    %98 = vector.load %arg13[%c0_43, %c0_44] : memref<128x32xbf16, #tpu.memory_space<vmem>>, vector<128x32xbf16>
    %cst_45 = arith.constant dense<0.000000e+00> : vector<8x32xf32>
    %99 = tpu.matmul %97, %98, %cst_45 {dimension_numbers = #tpu.dot_dimension_numbers<[1], [0], [0], [1], [0, 0, 1, 1], [], []>} : vector<8x128xbf16>, vector<128x32xbf16>, vector<8x32xf32> -> vector<8x32xf32>
    %c0_46 = arith.constant 0 : index
    %c0_47 = arith.constant 0 : index
    %100 = vector.load %arg14[%c0_46, %c0_47] : memref<1x32xf32, #tpu.memory_space<vmem>>, vector<1x32xf32>
    %101 = vector.broadcast %100 : vector<1x32xf32> to vector<8x32xf32>
    %102 = arith.addf %99, %101 : vector<8x32xf32>
    %103 = arith.addf %64, %102 : vector<8x32xf32>
    %c0_48 = arith.constant 0 : index
    %c0_49 = arith.constant 0 : index
    %104 = vector.load %arg15[%c0_48, %c0_49] : memref<8x32xf32, #tpu.memory_space<vmem>>, vector<8x32xf32>
    tpu.vector_store %arg15[%c0_48, %c0_49], %103 {strides = array<i32>} : memref<8x32xf32, #tpu.memory_space<vmem>>, vector<8x32xf32>,
    return
  }
  func.func @transform_0(%arg0: i32) -> (i32, i32) {
    %c0_i32 = arith.constant 0 : i32
    %c0_i32_0 = arith.constant 0 : i32
    return %arg0, %c0_i32 : i32, i32
  }
  func.func @transform_1(%arg0: i32) -> (i32, i32) {
    %c0_i32 = arith.constant 0 : i32
    %c0_i32_0 = arith.constant 0 : i32
    %c0_i32_1 = arith.constant 0 : i32
    return %c0_i32, %c0_i32_0 : i32, i32
  }
  func.func @transform_2(%arg0: i32) -> (i32, i32) {
    %c0_i32 = arith.constant 0 : i32
    %c0_i32_0 = arith.constant 0 : i32
    %c0_i32_1 = arith.constant 0 : i32
    return %c0_i32, %c0_i32_0 : i32, i32
  }
  func.func @transform_3(%arg0: i32) -> (i32, i32) {
    %c0_i32 = arith.constant 0 : i32
    %c0_i32_0 = arith.constant 0 : i32
    %c0_i32_1 = arith.constant 0 : i32
    return %c0_i32, %c0_i32_0 : i32, i32
  }
  func.func @transform_4(%arg0: i32) -> (i32, i32) {
    %c0_i32 = arith.constant 0 : i32
    %c0_i32_0 = arith.constant 0 : i32
    %c0_i32_1 = arith.constant 0 : i32
    return %c0_i32, %c0_i32_0 : i32, i32
  }
  func.func @transform_5(%arg0: i32) -> (i32, i32) {
    %c0_i32 = arith.constant 0 : i32
    %c0_i32_0 = arith.constant 0 : i32
    %c0_i32_1 = arith.constant 0 : i32
    return %c0_i32, %c0_i32_0 : i32, i32
  }
  func.func @transform_6(%arg0: i32) -> (i32, i32) {
    %c0_i32 = arith.constant 0 : i32
    %c0_i32_0 = arith.constant 0 : i32
    %c0_i32_1 = arith.constant 0 : i32
    return %c0_i32, %c0_i32_0 : i32, i32
  }
  func.func @transform_7(%arg0: i32) -> (i32, i32) {
    %c0_i32 = arith.constant 0 : i32
    %c0_i32_0 = arith.constant 0 : i32
    %c0_i32_1 = arith.constant 0 : i32
    return %c0_i32, %c0_i32_0 : i32, i32
  }
  func.func @transform_8(%arg0: i32) -> (i32, i32) {
    %c0_i32 = arith.constant 0 : i32
    %c0_i32_0 = arith.constant 0 : i32
    %c0_i32_1 = arith.constant 0 : i32
    return %c0_i32, %c0_i32_0 : i32, i32
  }
  func.func @transform_9(%arg0: i32) -> (i32, i32) {
    %c0_i32 = arith.constant 0 : i32
    %c0_i32_0 = arith.constant 0 : i32
    %c0_i32_1 = arith.constant 0 : i32
    return %c0_i32, %c0_i32_0 : i32, i32
  }
  func.func @transform_10(%arg0: i32) -> (i32, i32) {
    %c0_i32 = arith.constant 0 : i32
    %c0_i32_0 = arith.constant 0 : i32
    %c0_i32_1 = arith.constant 0 : i32
    return %c0_i32, %c0_i32_0 : i32, i32
  }
  func.func @transform_11(%arg0: i32) -> (i32, i32) {
    %c0_i32 = arith.constant 0 : i32
    %c0_i32_0 = arith.constant 0 : i32
    %c0_i32_1 = arith.constant 0 : i32
    return %c0_i32, %c0_i32_0 : i32, i32
  }
  func.func @transform_12(%arg0: i32) -> (i32, i32) {
    %c0_i32 = arith.constant 0 : i32
    %c0_i32_0 = arith.constant 0 : i32
    %c0_i32_1 = arith.constant 0 : i32
    return %c0_i32, %c0_i32_0 : i32, i32
  }
  func.func @transform_13(%arg0: i32) -> (i32, i32) {
    %c0_i32 = arith.constant 0 : i32
    %c0_i32_0 = arith.constant 0 : i32
    %c0_i32_1 = arith.constant 0 : i32
    return %c0_i32, %c0_i32_0 : i32, i32
  }
  func.func @transform_14(%arg0: i32) -> (i32, i32) {
    %c0_i32 = arith.constant 0 : i32
    %c0_i32_0 = arith.constant 0 : i32
    return %arg0, %c0_i32 : i32, i32
  }
}

</mosaic_0001>

<llo_original>
// kernel: tpu_custom_call.1
$region0: #{tpu_custom_call.1}
  #allocation0 [shape = 'u32[]', space=smem, size = 0x4, offset = 0x4, fixed_abs, tag = 'smem constant byte address 0x4 - core index']
  #allocation1 [shape = 'u32[144,128]{1,0:T(1,128)}', space=vmem, size = 0x12000, scoped, tag = 'internal scratch']
  %s0 = inlined_call_operand.vmem [shape: f32[16,32], index: 0, kind: input, shape index: {}]
  %s1 = inlined_call_operand.vmem [shape: f32[1,32], index: 1, kind: input, shape index: {}]
  %s2 = inlined_call_operand.vmem [shape: f32[1,32], index: 2, kind: input, shape index: {}]
  %s3 = inlined_call_operand.vmem [shape: bf16[32,32], index: 3, kind: input, shape index: {}]
  %s4 = inlined_call_operand.vmem [shape: bf16[32,32], index: 4, kind: input, shape index: {}]
  %s5 = inlined_call_operand.vmem [shape: bf16[32,32], index: 5, kind: input, shape index: {}]
  %s6 = inlined_call_operand.vmem [shape: bf16[32,32], index: 6, kind: input, shape index: {}]
  %s7 = inlined_call_operand.hbm [shape: f32[1,32], index: 7, kind: input, shape index: {}]
  %s8 = inlined_call_operand.hbm [shape: f32[1,32], index: 8, kind: input, shape index: {}]
  %s9 = inlined_call_operand.hbm [shape: f32[1,32], index: 9, kind: input, shape index: {}]
  %s10 = inlined_call_operand.vmem [shape: bf16[32,128], index: 10, kind: input, shape index: {}]
  %s11 = inlined_call_operand.vmem [shape: f32[1,128], index: 11, kind: input, shape index: {}]
  %s12 = inlined_call_operand.vmem [shape: bf16[128,32], index: 12, kind: input, shape index: {}]
  %s13 = inlined_call_operand.vmem [shape: f32[1,32], index: 13, kind: input, shape index: {}]
  %s14 = inlined_call_operand.hbm [shape: f32[16,32], index: 14, kind: output, shape index: {}]
  %s15 = sld [smem:[#allocation0]]
  $region101: #{tpu_custom_call.1} parent=0
    _
  %s17 = ssub.s32 1, %s15
  %s18 = scalar_select 0, %s17, %s15
  $region1: #{tpu_custom_call.1} parent=0
    #allocation2 [shape = 'u8[512]{0}', space=vmem, size = 0x400, scoped, tag = 'input window, operand 7, single buffered']
    #allocation3 [shape = 's32[2]{0}', space=sflag, size = 0x8, scoped, tag = 'scoped memory for tpu_custom_call.1']
    #allocation4 [shape = 's32[2]{0}', space=sflag, size = 0x8, scoped, tag = 'scoped memory for tpu_custom_call.1']
    #allocation5 [shape = 'u8[512]{0}', space=vmem, size = 0x400, scoped, tag = 'input window, operand 8, single buffered']
    #allocation6 [shape = 's32[1]{0}', space=sflag, size = 0x4, scoped, tag = 'scoped memory for tpu_custom_call.1']
    #allocation7 [shape = 'u8[512]{0}', space=vmem, size = 0x400, scoped, tag = 'input window, operand 9, single buffered']
    #allocation8 [shape = 'u8[8192]{0}', space=vmem, size = 0x2000, scoped, tag = 'output window, operand 0']
    %19 = vsyncpa [#allocation3], 0
    %20 = vsyncpa [#allocation6], 0
    %21 = vsyncpa [#allocation4], 0
    %s22 = scalar_lea.sflag [#allocation4], 1
    %23 = vsyncpa %s22, 0
    loop: start=0, step=1, limit=4
    $region2: #{tpu_custom_call.1} parent=1 // loop_pre_header
      _
    $region3: #{tpu_custom_call.1} parent=1 // loop_header
      %s25 = sphi 0, %s29
      %p26 = scmp.ge.s32.totalorder %s25, 4
      %s35 = sphi 0, %s37
      %s38 = sphi 0, %s35
      %s39 = sphi 0, %s38
      %s55 = sphi 0, %s39
      %s59 = sphi 0, %s59
      %s61 = sphi 0, %s59
      %s62 = sphi 0, %s61
      %s76 = sphi 0, %s62
      %s80 = sphi 0, %s80
      %s82 = sphi 0, %s80
      %s83 = sphi 0, %s82
      %s97 = sphi 0, %s83
      %s101 = sphi 0, %s101
      %s103 = sphi 0, %s101
      %s104 = sphi 0, %s103
      %s118 = sphi 0, %s104
      %s122 = sphi 0, %s122
      %s124 = sphi 0, %s122
      %s125 = sphi 0, %s124
      %s139 = sphi 0, %s125
      %s143 = sphi 0, %s143
      %s145 = sphi 0, %s143
      %s146 = sphi 0, %s145
      %s160 = sphi 0, %s146
      %s164 = sphi 0, %s164
      %s166 = sphi 0, %s164
      %s167 = sphi 0, %s166
      %s181 = sphi 0, %s167
      %s185 = sphi 0, %s185
      %s187 = sphi 0, %s185
      %s188 = sphi 0, %s187
      %s202 = sphi 0, %s188
      %s206 = sphi 0, %s206
      %s208 = sphi 0, %s206
      %s209 = sphi 0, %s208
      %s223 = sphi 0, %s209
      %s227 = sphi 0, %s227
      %s229 = sphi 0, %s227
      %s230 = sphi 0, %s229
      %s244 = sphi 0, %s230
      %s248 = sphi 0, %s248
      %s250 = sphi 0, %s248
      %s251 = sphi 0, %s250
      %s265 = sphi 0, %s251
      %s269 = sphi 0, %s269
      %s271 = sphi 0, %s269
      %s272 = sphi 0, %s271
      %s286 = sphi 0, %s272
      %s290 = sphi 0, %s290
      %s292 = sphi 0, %s290
      %s293 = sphi 0, %s292
      %s307 = sphi 0, %s293
      %s311 = sphi 0, %s311
      %s313 = sphi 0, %s311
      %s314 = sphi 0, %s313
      %s328 = sphi 0, %s314
      %s334 = sphi 0, %s336
      %s337 = sphi 0, %s334
      %s338 = sphi 0, %s337
      %s354 = sphi 0, %s338
    $region4: #{tpu_custom_call.1} parent=1 // loop_header_branch
      %28 = sbr.rel (%p26) target = $region8
    $region5: #{tpu_custom_call.1} parent=1 // loop_body
      %s30 = ssub.s32 %s25, 1
      %s31 = ssub.s32 %s25, 2
      %s32 = sadd.s32 %s25, 1
      %s33 = ssub.s32 %s25, %s32
      %p34 = scmp.eq.s32.totalorder %s33, 0
      %s36 = sadd.s32 %s35, 1
      %s37 = scalar_select %p34, %s35, %s36
      %p40 = pneg %p34
      %p41 = scmp.eq.s32.totalorder %s25, 1
      %p42 = por %p40, %p41
      %p43 = scmp.ne.s32.totalorder %s35, %s38
      %p44 = scmp.eq.s32.totalorder %s25, 0
      %p45 = por %p43, %p44
      %p46 = scmp.ne.s32.totalorder %s35, %s38
      %p47 = scmp.eq.s32.totalorder %s30, 1
      %p48 = por %p46, %p47
      %p49 = scmp.ne.s32.totalorder %s38, %s39
      %p50 = scmp.eq.s32.totalorder %s30, 0
      %p51 = por %p49, %p50
      %p52 = scmp.ne.s32.totalorder %s38, %s39
      %p53 = scmp.eq.s32.totalorder %s31, 1
      %p54 = por %p52, %p53
      %p56 = scmp.ne.s32.totalorder %s39, %s55
      %p57 = scmp.eq.s32.totalorder %s31, 0
      %p58 = por %p56, %p57
      %s60 = sadd.s32 %s59, 1
      %p63 = scmp.eq.s32.totalorder %s25, 1
      %p64 = scmp.ne.s32.totalorder %s59, %s61
      %p65 = scmp.eq.s32.totalorder %s25, 0
      %p66 = por %p64, %p65
      %p67 = scmp.ne.s32.totalorder %s59, %s61
      %p68 = scmp.eq.s32.totalorder %s30, 1
      %p69 = por %p67, %p68
      %p70 = scmp.ne.s32.totalorder %s61, %s62
      %p71 = scmp.eq.s32.totalorder %s30, 0
      %p72 = por %p70, %p71
      %p73 = scmp.ne.s32.totalorder %s61, %s62
      %p74 = scmp.eq.s32.totalorder %s31, 1
      %p75 = por %p73, %p74
      %p77 = scmp.ne.s32.totalorder %s62, %s76
      %p78 = scmp.eq.s32.totalorder %s31, 0
      %p79 = por %p77, %p78
      %s81 = sadd.s32 %s80, 1
      %p84 = scmp.eq.s32.totalorder %s25, 1
      %p85 = scmp.ne.s32.totalorder %s80, %s82
      %p86 = scmp.eq.s32.totalorder %s25, 0
      %p87 = por %p85, %p86
      %p88 = scmp.ne.s32.totalorder %s80, %s82
      %p89 = scmp.eq.s32.totalorder %s30, 1
      %p90 = por %p88, %p89
      %p91 = scmp.ne.s32.totalorder %s82, %s83
      %p92 = scmp.eq.s32.totalorder %s30, 0
      %p93 = por %p91, %p92
      %p94 = scmp.ne.s32.totalorder %s82, %s83
      %p95 = scmp.eq.s32.totalorder %s31, 1
      %p96 = por %p94, %p95
      %p98 = scmp.ne.s32.totalorder %s83, %s97
      %p99 = scmp.eq.s32.totalorder %s31, 0
      %p100 = por %p98, %p99
      %s102 = sadd.s32 %s101, 1
      %p105 = scmp.eq.s32.totalorder %s25, 1
      %p106 = scmp.ne.s32.totalorder %s101, %s103
      %p107 = scmp.eq.s32.totalorder %s25, 0
      %p108 = por %p106, %p107
      %p109 = scmp.ne.s32.totalorder %s101, %s103
      %p110 = scmp.eq.s32.totalorder %s30, 1
      %p111 = por %p109, %p110
      %p112 = scmp.ne.s32.totalorder %s103, %s104
      %p113 = scmp.eq.s32.totalorder %s30, 0
      %p114 = por %p112, %p113
      %p115 = scmp.ne.s32.totalorder %s103, %s104
      %p116 = scmp.eq.s32.totalorder %s31, 1
      %p117 = por %p115, %p116
      %p119 = scmp.ne.s32.totalorder %s104, %s118
      %p120 = scmp.eq.s32.totalorder %s31, 0
      %p121 = por %p119, %p120
      %s123 = sadd.s32 %s122, 1
      %p126 = scmp.eq.s32.totalorder %s25, 1
      %p127 = scmp.ne.s32.totalorder %s122, %s124
      %p128 = scmp.eq.s32.totalorder %s25, 0
      %p129 = por %p127, %p128
      %p130 = scmp.ne.s32.totalorder %s122, %s124
      %p131 = scmp.eq.s32.totalorder %s30, 1
      %p132 = por %p130, %p131
      %p133 = scmp.ne.s32.totalorder %s124, %s125
      %p134 = scmp.eq.s32.totalorder %s30, 0
      %p135 = por %p133, %p134
      %p136 = scmp.ne.s32.totalorder %s124, %s125
      %p137 = scmp.eq.s32.totalorder %s31, 1
      %p138 = por %p136, %p137
      %p140 = scmp.ne.s32.totalorder %s125, %s139
      %p141 = scmp.eq.s32.totalorder %s31, 0
      %p142 = por %p140, %p141
      %s144 = sadd.s32 %s143, 1
      %p147 = scmp.eq.s32.totalorder %s25, 1
      %p148 = scmp.ne.s32.totalorder %s143, %s145
      %p149 = scmp.eq.s32.totalorder %s25, 0
      %p150 = por %p148, %p149
      %p151 = scmp.ne.s32.totalorder %s143, %s145
      %p152 = scmp.eq.s32.totalorder %s30, 1
      %p153 = por %p151, %p152
      %p154 = scmp.ne.s32.totalorder %s145, %s146
      %p155 = scmp.eq.s32.totalorder %s30, 0
      %p156 = por %p154, %p155
      %p157 = scmp.ne.s32.totalorder %s145, %s146
      %p158 = scmp.eq.s32.totalorder %s31, 1
      %p159 = por %p157, %p158
      %p161 = scmp.ne.s32.totalorder %s146, %s160
      %p162 = scmp.eq.s32.totalorder %s31, 0
      %p163 = por %p161, %p162
      %s165 = sadd.s32 %s164, 1
      %p168 = scmp.eq.s32.totalorder %s25, 1
      %p169 = scmp.ne.s32.totalorder %s164, %s166
      %p170 = scmp.eq.s32.totalorder %s25, 0
      %p171 = por %p169, %p170
      %p172 = scmp.ne.s32.totalorder %s164, %s166
      %p173 = scmp.eq.s32.totalorder %s30, 1
      %p174 = por %p172, %p173
      %p175 = scmp.ne.s32.totalorder %s166, %s167
      %p176 = scmp.eq.s32.totalorder %s30, 0
      %p177 = por %p175, %p176
      %p178 = scmp.ne.s32.totalorder %s166, %s167
      %p179 = scmp.eq.s32.totalorder %s31, 1
      %p180 = por %p178, %p179
      %p182 = scmp.ne.s32.totalorder %s167, %s181
      %p183 = scmp.eq.s32.totalorder %s31, 0
      %p184 = por %p182, %p183
      %s186 = sadd.s32 %s185, 1
      %p189 = scmp.eq.s32.totalorder %s25, 1
      %p190 = scmp.ne.s32.totalorder %s185, %s187
      %p191 = scmp.eq.s32.totalorder %s25, 0
      %p192 = por %p190, %p191
      %p193 = scmp.ne.s32.totalorder %s185, %s187
      %p194 = scmp.eq.s32.totalorder %s30, 1
      %p195 = por %p193, %p194
      %p196 = scmp.ne.s32.totalorder %s187, %s188
      %p197 = scmp.eq.s32.totalorder %s30, 0
      %p198 = por %p196, %p197
      %p199 = scmp.ne.s32.totalorder %s187, %s188
      %p200 = scmp.eq.s32.totalorder %s31, 1
      %p201 = por %p199, %p200
      %p203 = scmp.ne.s32.totalorder %s188, %s202
      %p204 = scmp.eq.s32.totalorder %s31, 0
      %p205 = por %p203, %p204
      %s207 = sadd.s32 %s206, 1
      %p210 = scmp.eq.s32.totalorder %s25, 1
      %p211 = scmp.ne.s32.totalorder %s206, %s208
      %p212 = scmp.eq.s32.totalorder %s25, 0
      %p213 = por %p211, %p212
      %p214 = scmp.ne.s32.totalorder %s206, %s208
      %p215 = scmp.eq.s32.totalorder %s30, 1
      %p216 = por %p214, %p215
      %p217 = scmp.ne.s32.totalorder %s208, %s209
      %p218 = scmp.eq.s32.totalorder %s30, 0
      %p219 = por %p217, %p218
      %p220 = scmp.ne.s32.totalorder %s208, %s209
      %p221 = scmp.eq.s32.totalorder %s31, 1
      %p222 = por %p220, %p221
      %p224 = scmp.ne.s32.totalorder %s209, %s223
      %p225 = scmp.eq.s32.totalorder %s31, 0
      %p226 = por %p224, %p225
      %s228 = sadd.s32 %s227, 1
      %p231 = scmp.eq.s32.totalorder %s25, 1
      %p232 = scmp.ne.s32.totalorder %s227, %s229
      %p233 = scmp.eq.s32.totalorder %s25, 0
      %p234 = por %p232, %p233
      %p235 = scmp.ne.s32.totalorder %s227, %s229
      %p236 = scmp.eq.s32.totalorder %s30, 1
      %p237 = por %p235, %p236
      %p238 = scmp.ne.s32.totalorder %s229, %s230
      %p239 = scmp.eq.s32.totalorder %s30, 0
      %p240 = por %p238, %p239
      %p241 = scmp.ne.s32.totalorder %s229, %s230
      %p242 = scmp.eq.s32.totalorder %s31, 1
      %p243 = por %p241, %p242
      %p245 = scmp.ne.s32.totalorder %s230, %s244
      %p246 = scmp.eq.s32.totalorder %s31, 0
      %p247 = por %p245, %p246
      %s249 = sadd.s32 %s248, 1
      %p252 = scmp.eq.s32.totalorder %s25, 1
      %p253 = scmp.ne.s32.totalorder %s248, %s250
      %p254 = scmp.eq.s32.totalorder %s25, 0
      %p255 = por %p253, %p254
      %p256 = scmp.ne.s32.totalorder %s248, %s250
      %p257 = scmp.eq.s32.totalorder %s30, 1
      %p258 = por %p256, %p257
      %p259 = scmp.ne.s32.totalorder %s250, %s251
      %p260 = scmp.eq.s32.totalorder %s30, 0
      %p261 = por %p259, %p260
      %p262 = scmp.ne.s32.totalorder %s250, %s251
      %p263 = scmp.eq.s32.totalorder %s31, 1
      %p264 = por %p262, %p263
      %p266 = scmp.ne.s32.totalorder %s251, %s265
      %p267 = scmp.eq.s32.totalorder %s31, 0
      %p268 = por %p266, %p267
      %s270 = sadd.s32 %s269, 1
      %p273 = scmp.eq.s32.totalorder %s25, 1
      %p274 = scmp.ne.s32.totalorder %s269, %s271
      %p275 = scmp.eq.s32.totalorder %s25, 0
      %p276 = por %p274, %p275
      %p277 = scmp.ne.s32.totalorder %s269, %s271
      %p278 = scmp.eq.s32.totalorder %s30, 1
      %p279 = por %p277, %p278
      %p280 = scmp.ne.s32.totalorder %s271, %s272
      %p281 = scmp.eq.s32.totalorder %s30, 0
      %p282 = por %p280, %p281
      %p283 = scmp.ne.s32.totalorder %s271, %s272
      %p284 = scmp.eq.s32.totalorder %s31, 1
      %p285 = por %p283, %p284
      %p287 = scmp.ne.s32.totalorder %s272, %s286
      %p288 = scmp.eq.s32.totalorder %s31, 0
      %p289 = por %p287, %p288
      %s291 = sadd.s32 %s290, 1
      %p294 = scmp.eq.s32.totalorder %s25, 1
      %p295 = scmp.ne.s32.totalorder %s290, %s292
      %p296 = scmp.eq.s32.totalorder %s25, 0
      %p297 = por %p295, %p296
      %p298 = scmp.ne.s32.totalorder %s290, %s292
      %p299 = scmp.eq.s32.totalorder %s30, 1
      %p300 = por %p298, %p299
      %p301 = scmp.ne.s32.totalorder %s292, %s293
      %p302 = scmp.eq.s32.totalorder %s30, 0
      %p303 = por %p301, %p302
      %p304 = scmp.ne.s32.totalorder %s292, %s293
      %p305 = scmp.eq.s32.totalorder %s31, 1
      %p306 = por %p304, %p305
      %p308 = scmp.ne.s32.totalorder %s293, %s307
      %p309 = scmp.eq.s32.totalorder %s31, 0
      %p310 = por %p308, %p309
      %s312 = sadd.s32 %s311, 1
      %p315 = scmp.eq.s32.totalorder %s25, 1
      %p316 = scmp.ne.s32.totalorder %s311, %s313
      %p317 = scmp.eq.s32.totalorder %s25, 0
      %p318 = por %p316, %p317
      %p319 = scmp.ne.s32.totalorder %s311, %s313
      %p320 = scmp.eq.s32.totalorder %s30, 1
      %p321 = por %p319, %p320
      %p322 = scmp.ne.s32.totalorder %s313, %s314
      %p323 = scmp.eq.s32.totalorder %s30, 0
      %p324 = por %p322, %p323
      %p325 = scmp.ne.s32.totalorder %s313, %s314
      %p326 = scmp.eq.s32.totalorder %s31, 1
      %p327 = por %p325, %p326
      %p329 = scmp.ne.s32.totalorder %s314, %s328
      %p330 = scmp.eq.s32.totalorder %s31, 0
      %p331 = por %p329, %p330
      %s332 = ssub.s32 %s25, %s32
      %p333 = scmp.eq.s32.totalorder %s332, 0
      %s335 = sadd.s32 %s334, 1
      %s336 = scalar_select %p333, %s334, %s335
      %p339 = pneg %p333
      %p340 = scmp.eq.s32.totalorder %s25, 1
      %p341 = por %p339, %p340
      %p342 = scmp.ne.s32.totalorder %s334, %s337
      %p343 = scmp.eq.s32.totalorder %s25, 0
      %p344 = por %p342, %p343
      %p345 = scmp.ne.s32.totalorder %s334, %s337
      %p346 = scmp.eq.s32.totalorder %s30, 1
      %p347 = por %p345, %p346
      %p348 = scmp.ne.s32.totalorder %s337, %s338
      %p349 = scmp.eq.s32.totalorder %s30, 0
      %p350 = por %p348, %p349
      %p351 = scmp.ne.s32.totalorder %s337, %s338
      %p352 = scmp.eq.s32.totalorder %s31, 1
      %p353 = por %p351, %p352
      %p355 = scmp.ne.s32.totalorder %s338, %s354
      %p356 = scmp.eq.s32.totalorder %s31, 0
      %p357 = por %p355, %p356
      %p358 = scmp.le.s32.totalorder 1, %s25
      %p359 = scmp.lt.s32.totalorder %s25, 3
      %p360 = pnand %p358, %p359
      %p361 = pneg %p360
      // Predicated region
      $region9: #{tpu_custom_call.1} parent=5 // pred_check
        _
      $region10: #{tpu_custom_call.1} parent=5 // pred_check_branch
        %363 = sbr.rel (%p360) target = $region12
      $region11: #{tpu_custom_call.1} parent=5 // pred_region
        %s364 = ssub.s32 %s25, 1
        // Predicated region
        $region13: #{tpu_custom_call.1} parent=11 // pred_check
          %p365 = pneg %p72
        $region14: #{tpu_custom_call.1} parent=11 // pred_check_branch
          %367 = sbr.rel (%p365) target = $region16
        $region15: #{tpu_custom_call.1} parent=11 // pred_region
          _
        $region16: #{tpu_custom_call.1} parent=11 // pred_fallthru
          _
        // Predicated region
        $region17: #{tpu_custom_call.1} parent=11 // pred_check
          %p368 = pneg %p93
        $region18: #{tpu_custom_call.1} parent=11 // pred_check_branch
          %370 = sbr.rel (%p368) target = $region20
        $region19: #{tpu_custom_call.1} parent=11 // pred_region
          _
        $region20: #{tpu_custom_call.1} parent=11 // pred_fallthru
          _
        // Predicated region
        $region21: #{tpu_custom_call.1} parent=11 // pred_check
          %p371 = pneg %p114
        $region22: #{tpu_custom_call.1} parent=11 // pred_check_branch
          %373 = sbr.rel (%p371) target = $region24
        $region23: #{tpu_custom_call.1} parent=11 // pred_region
          _
        $region24: #{tpu_custom_call.1} parent=11 // pred_fallthru
          _
        // Predicated region
        $region25: #{tpu_custom_call.1} parent=11 // pred_check
          %p374 = pneg %p135
        $region26: #{tpu_custom_call.1} parent=11 // pred_check_branch
          %376 = sbr.rel (%p374) target = $region28
        $region27: #{tpu_custom_call.1} parent=11 // pred_region
          _
        $region28: #{tpu_custom_call.1} parent=11 // pred_fallthru
          _
        // Predicated region
        $region29: #{tpu_custom_call.1} parent=11 // pred_check
          %p377 = pneg %p156
        $region30: #{tpu_custom_call.1} parent=11 // pred_check_branch
          %379 = sbr.rel (%p377) target = $region32
        $region31: #{tpu_custom_call.1} parent=11 // pred_region
          _
        $region32: #{tpu_custom_call.1} parent=11 // pred_fallthru
          _
        // Predicated region
        $region33: #{tpu_custom_call.1} parent=11 // pred_check
          %p380 = pneg %p177
        $region34: #{tpu_custom_call.1} parent=11 // pred_check_branch
          %382 = sbr.rel (%p380) target = $region36
        $region35: #{tpu_custom_call.1} parent=11 // pred_region
          _
        $region36: #{tpu_custom_call.1} parent=11 // pred_fallthru
          _
        // Predicated region
        $region37: #{tpu_custom_call.1} parent=11 // pred_check
          %p383 = pneg %p198
        $region38: #{tpu_custom_call.1} parent=11 // pred_check_branch
          %385 = sbr.rel (%p383) target = $region40
        $region39: #{tpu_custom_call.1} parent=11 // pred_region
          %s387 = ssub.s32 16, 16
          %388 = vsyncadd [#allocation3], %s387
          %s390 = sshll.u32 [#allocation2], 4
          %s391 = int_to_ptr.vmem [resolvable:$true] %s390
          %393 = dma.hbm_to_vmem [thread:$0]  %s7, 16, %s391, [#allocation3]
        $region40: #{tpu_custom_call.1} parent=11 // pred_fallthru
          _
        // Predicated region
        $region41: #{tpu_custom_call.1} parent=11 // pred_check
          %p394 = pneg %p219
        $region42: #{tpu_custom_call.1} parent=11 // pred_check_branch
          %396 = sbr.rel (%p394) target = $region44
        $region43: #{tpu_custom_call.1} parent=11 // pred_region
          %s398 = ssub.s32 16, 16
          %399 = vsyncadd [#allocation6], %s398
          %s401 = sshll.u32 [#allocation5], 4
          %s402 = int_to_ptr.vmem [resolvable:$true] %s401
          %404 = dma.hbm_to_vmem [thread:$0]  %s8, 16, %s402, [#allocation6]
        $region44: #{tpu_custom_call.1} parent=11 // pred_fallthru
          _
        // Predicated region
        $region45: #{tpu_custom_call.1} parent=11 // pred_check
          %p405 = pneg %p240
        $region46: #{tpu_custom_call.1} parent=11 // pred_check_branch
          %407 = sbr.rel (%p405) target = $region48
        $region47: #{tpu_custom_call.1} parent=11 // pred_region
          %s409 = ssub.s32 16, 16
          %410 = vsyncadd [#allocation6], %s409
          %s412 = sshll.u32 [#allocation7], 4
          %s413 = int_to_ptr.vmem [resolvable:$true] %s412
          %415 = dma.hbm_to_vmem [thread:$0]  %s9, 16, %s413, [#allocation6]
        $region48: #{tpu_custom_call.1} parent=11 // pred_fallthru
          _
        // Predicated region
        $region49: #{tpu_custom_call.1} parent=11 // pred_check
          %p416 = pneg %p261
        $region50: #{tpu_custom_call.1} parent=11 // pred_check_branch
          %418 = sbr.rel (%p416) target = $region52
        $region51: #{tpu_custom_call.1} parent=11 // pred_region
          _
        $region52: #{tpu_custom_call.1} parent=11 // pred_fallthru
          _
        // Predicated region
        $region53: #{tpu_custom_call.1} parent=11 // pred_check
          %p419 = pneg %p282
        $region54: #{tpu_custom_call.1} parent=11 // pred_check_branch
          %421 = sbr.rel (%p419) target = $region56
        $region55: #{tpu_custom_call.1} parent=11 // pred_region
          _
        $region56: #{tpu_custom_call.1} parent=11 // pred_fallthru
          _
        // Predicated region
        $region57: #{tpu_custom_call.1} parent=11 // pred_check
          %p422 = pneg %p303
        $region58: #{tpu_custom_call.1} parent=11 // pred_check_branch
          %424 = sbr.rel (%p422) target = $region60
        $region59: #{tpu_custom_call.1} parent=11 // pred_region
          _
        $region60: #{tpu_custom_call.1} parent=11 // pred_fallthru
          _
        // Predicated region
        $region61: #{tpu_custom_call.1} parent=11 // pred_check
          %p425 = pneg %p324
        $region62: #{tpu_custom_call.1} parent=11 // pred_check_branch
          %427 = sbr.rel (%p425) target = $region64
        $region63: #{tpu_custom_call.1} parent=11 // pred_region
          _
        $region64: #{tpu_custom_call.1} parent=11 // pred_fallthru
          _
      $region12: #{tpu_custom_call.1} parent=5 // pred_fallthru
        _
      %p428 = scmp.lt.s32.totalorder %s25, 2
      // Predicated region
      $region65: #{tpu_custom_call.1} parent=5 // pred_check
        %p429 = pneg %p428
      $region66: #{tpu_custom_call.1} parent=5 // pred_check_branch
        %431 = sbr.rel (%p429) target = $region68
      $region67: #{tpu_custom_call.1} parent=5 // pred_region
        // Predicated region
        $region69: #{tpu_custom_call.1} parent=67 // pred_check
          %p432 = pneg %p45
        $region70: #{tpu_custom_call.1} parent=67 // pred_check_branch
          %434 = sbr.rel (%p432) target = $region72
        $region71: #{tpu_custom_call.1} parent=67 // pred_region
          %p435 = scmp.lt.s32.totalorder %s25, 1
          %s436 = scalar_select %p435, %s25, 1
          %s437 = smul.addr %s436, 8
          %s438 = scalar_lea.vmem %s0, %s437
        $region72: #{tpu_custom_call.1} parent=67 // pred_fallthru
          _
      $region68: #{tpu_custom_call.1} parent=5 // pred_fallthru
        _
      %p439 = scmp.le.s32.totalorder 1, %s25
      %p440 = scmp.lt.s32.totalorder %s25, 3
      %p441 = pnand %p439, %p440
      %p442 = pneg %p441
      // Predicated region
      $region73: #{tpu_custom_call.1} parent=5 // pred_check
        _
      $region74: #{tpu_custom_call.1} parent=5 // pred_check_branch
        %444 = sbr.rel (%p441) target = $region76
      $region75: #{tpu_custom_call.1} parent=5 // pred_region
        %s445 = ssub.s32 %s25, 1
        // Predicated region
        $region77: #{tpu_custom_call.1} parent=75 // pred_check
          %p446 = pneg %p198
        $region78: #{tpu_custom_call.1} parent=75 // pred_check_branch
          %448 = sbr.rel (%p446) target = $region80
        $region79: #{tpu_custom_call.1} parent=75 // pred_region
          %449 = dma.done [#allocation3], 16
        $region80: #{tpu_custom_call.1} parent=75 // pred_fallthru
          _
        // Predicated region
        $region81: #{tpu_custom_call.1} parent=75 // pred_check
          %p450 = pneg %p219
        $region82: #{tpu_custom_call.1} parent=75 // pred_check_branch
          %452 = sbr.rel (%p450) target = $region84
        $region83: #{tpu_custom_call.1} parent=75 // pred_region
          %453 = dma.done [#allocation6], 16
        $region84: #{tpu_custom_call.1} parent=75 // pred_fallthru
          _
        // Predicated region
        $region85: #{tpu_custom_call.1} parent=75 // pred_check
          %p454 = pneg %p240
        $region86: #{tpu_custom_call.1} parent=75 // pred_check_branch
          %456 = sbr.rel (%p454) target = $region88
        $region87: #{tpu_custom_call.1} parent=75 // pred_region
          %457 = dma.done [#allocation6], 16
        $region88: #{tpu_custom_call.1} parent=75 // pred_fallthru
          _
        %p458 = scmp.lt.s32.totalorder %s30, 1
        %s459 = scalar_select %p458, %s30, 1
        %s460 = smul.addr %s459, 8
        %s461 = scalar_lea.vmem %s0, %s460
        %p462 = pneg %p51
        %p463 = pneg %p48
        %p464 = pneg %p72
        %p465 = pneg %p69
        %p466 = pneg %p93
        %p467 = pneg %p90
        %p468 = pneg %p114
        %p469 = pneg %p111
        %p470 = pneg %p135
        %p471 = pneg %p132
        %p472 = pneg %p156
        %p473 = pneg %p153
        %p474 = pneg %p177
        %p475 = pneg %p174
        %p476 = pneg %p198
        %p477 = pneg %p195
        %p478 = pneg %p219
        %p479 = pneg %p216
        %p480 = pneg %p240
        %p481 = pneg %p237
        %p482 = pneg %p261
        %p483 = pneg %p258
        %p484 = pneg %p282
        %p485 = pneg %p279
        %p486 = pneg %p303
        %p487 = pneg %p300
        %p488 = pneg %p324
        %p489 = pneg %p321
        %p490 = pneg %p350
        %p491 = pneg %p347
        %s492 = sand.u32 %s337, 1
        %s493 = scalar_lea.sflag [#allocation4], %s492
        %s494 = sand.u32 %s337, 1
        %s495 = smul.addr %s494, 8
        %s496 = scalar_lea.vmem [#allocation8], %s495
        %p497 = scmp.lt.s32.totalorder %s30, 1
        %s498 = scalar_select %p497, %s30, 1
        %s499 = smul.addr %s498, 8
        %s500 = scalar_lea.vmem %s0, %s499
        %v502 = vld [vmem:[%s500] sm:$0xff]
        %v503 = vld [vmem:[%s1] sm:$0x1]
        %v504 = vld [vmem:[%s2] sm:$0x1]
        %vm505 = vcmask 261120
        %v506 = vsel %vm505, %v502, 0.0
        %507 = vadd.xlane.f32.xlu0 %v506
        %v508 = vpop.xlane.xlu0 %507
        %v509 = vrcp.pop 32.0
        %v510 = vmul.f32 %v508, %v509
        %v511 = vsub.f32 %v502, %v510
        %v512 = vmul.f32 %v511, %v511
        %v513 = vsel %vm505, %v512, 0.0
        %514 = vadd.xlane.f32.xlu0 %v513
        %v515 = vpop.xlane.xlu0 %514
        %v516 = vmul.f32 %v515, %v509
        %v517 = vadd.f32 %v516, 1e-05
        %v518 = vrsqrt.pop %v517
        %v519 = vmul.f32 %v511, %v518
        %v521 = vlaneseq
        %v522 = vshrl.u32 %v521, 7
        %v523 = vsub.s32 0, %v522
        %v524 = vrot.slane %v503, %v523
        %v526 = vmul.f32 %v519, %v524
        %v528 = vlaneseq
        %v529 = vshrl.u32 %v528, 7
        %v530 = vsub.s32 0, %v529
        %v531 = vrot.slane %v504, %v530
        %v533 = vadd.f32 %v526, %v531
        %v534 = vpack.c.bf16 %v533, %v533
        %v535 = vld [vmem:[%s3] sm:$0xf]
        %v536 = vld [vmem:[%s3 + $0x4] sm:$0xf]
        %v537 = vld [vmem:[%s3 + $0x8] sm:$0xf]
        %v538 = vld [vmem:[%s3 + $0xc] sm:$0xf]
        %v543 = vunpack.c.l.b16 %v535
        %v544 = vunpack.c.l.b16 %v536
        %v545 = vunpack.c.l.b16 %v537
        %v546 = vunpack.c.l.b16 %v538
        %v547 = vpack.c.b16 %v544, %v543
        %v548 = vpack.c.b16 %v546, %v545
        %v552 = vsel %vm505, %v534, 0
        %554 = vmatprep.subr.bf16.mxu0 0
        %555 = vmatpush1.bf16.msra.mxu0 %v547
        %556 = vmatprep.subr.bf16.mxu0 0
        %557 = vmatpush1.bf16.msra.mxu0 %v548
        %558 = vmatprep.subr.bf16.mxu0 0
        %559 = vmatpush1.bf16.msra.mxu0 0
        %560 = vmatprep.subr.bf16.mxu0 0
        %561 = vmatpush1.bf16.msra.mxu0 0
        %562 = vmatprep.subr.bf16.mxu0 0
        %563 = vmatpush1.bf16.msra.mxu0 0
        %564 = vmatprep.subr.bf16.mxu0 0
        %565 = vmatpush1.bf16.msra.mxu0 0
        %566 = vmatprep.subr.bf16.mxu0 0
        %567 = vmatpush1.bf16.msra.mxu0 0
        %568 = vmatprep.subr.bf16.mxu0 0
        %569 = vmatpush1.bf16.msra.mxu0 0
        %570 = vmatprep.subr.bf16.mxu0 0
        %571 = vmatpush1.bf16.msra.mxu0 0
        %572 = vmatprep.subr.bf16.mxu0 0
        %573 = vmatpush1.bf16.msra.mxu0 0
        %574 = vmatprep.subr.bf16.mxu0 0
        %575 = vmatpush1.bf16.msra.mxu0 0
        %576 = vmatprep.subr.bf16.mxu0 0
        %577 = vmatpush1.bf16.msra.mxu0 0
        %578 = vmatprep.subr.bf16.mxu0 0
        %579 = vmatpush1.bf16.msra.mxu0 0
        %580 = vmatprep.subr.bf16.mxu0 0
        %581 = vmatpush1.bf16.msra.mxu0 0
        %582 = vmatprep.subr.bf16.mxu0 0
        %583 = vmatpush1.bf16.msra.mxu0 0
        %584 = vmatprep.subr.bf16.mxu0 0
        %585 = vmatpush1.bf16.msra.mxu0 0
        %586 = vmatprep.mubr.bf16.mxu0 0
        %587 = vmatmul.mubr.bf16.gmra.mrb[0].mxu0 %v552
        %v588 = vpop.f32.mrb[0].mxu0
        %v589 = vadd.f32 0.0, %v588
        %v590 = vpop.f32.mrb[0].mxu0
        %v591 = vpop.f32.mrb[0].mxu0
        %v592 = vpop.f32.mrb[0].mxu0
        %593 = vdwg.mxu0
        %v594 = vmul.f32 %v589, 0.35355338
        %v595 = vld [vmem:[%s4] sm:$0xf]
        %v596 = vld [vmem:[%s4 + $0x4] sm:$0xf]
        %v597 = vld [vmem:[%s4 + $0x8] sm:$0xf]
        %v598 = vld [vmem:[%s4 + $0xc] sm:$0xf]
        %v603 = vunpack.c.l.b16 %v595
        %v604 = vunpack.c.l.b16 %v596
        %v605 = vunpack.c.l.b16 %v597
        %v606 = vunpack.c.l.b16 %v598
        %v607 = vpack.c.b16 %v604, %v603
        %v608 = vpack.c.b16 %v606, %v605
        %611 = vmatprep.subr.bf16.mxu0 0
        %612 = vmatpush1.bf16.msra.mxu0 %v607
        %613 = vmatprep.subr.bf16.mxu0 0
        %614 = vmatpush1.bf16.msra.mxu0 %v608
        %615 = vmatprep.subr.bf16.mxu0 0
        %616 = vmatpush1.bf16.msra.mxu0 0
        %617 = vmatprep.subr.bf16.mxu0 0
        %618 = vmatpush1.bf16.msra.mxu0 0
        %619 = vmatprep.subr.bf16.mxu0 0
        %620 = vmatpush1.bf16.msra.mxu0 0
        %621 = vmatprep.subr.bf16.mxu0 0
        %622 = vmatpush1.bf16.msra.mxu0 0
        %623 = vmatprep.subr.bf16.mxu0 0
        %624 = vmatpush1.bf16.msra.mxu0 0
        %625 = vmatprep.subr.bf16.mxu0 0
        %626 = vmatpush1.bf16.msra.mxu0 0
        %627 = vmatprep.subr.bf16.mxu0 0
        %628 = vmatpush1.bf16.msra.mxu0 0
        %629 = vmatprep.subr.bf16.mxu0 0
        %630 = vmatpush1.bf16.msra.mxu0 0
        %631 = vmatprep.subr.bf16.mxu0 0
        %632 = vmatpush1.bf16.msra.mxu0 0
        %633 = vmatprep.subr.bf16.mxu0 0
        %634 = vmatpush1.bf16.msra.mxu0 0
        %635 = vmatprep.subr.bf16.mxu0 0
        %636 = vmatpush1.bf16.msra.mxu0 0
        %637 = vmatprep.subr.bf16.mxu0 0
        %638 = vmatpush1.bf16.msra.mxu0 0
        %639 = vmatprep.subr.bf16.mxu0 0
        %640 = vmatpush1.bf16.msra.mxu0 0
        %641 = vmatprep.subr.bf16.mxu0 0
        %642 = vmatpush1.bf16.msra.mxu0 0
        %643 = vmatprep.mubr.bf16.mxu0 0
        %644 = vmatmul.mubr.bf16.gmra.mrb[0].mxu0 %v552
        %v645 = vpop.f32.mrb[0].mxu0
        %v646 = vadd.f32 0.0, %v645
        %v647 = vpop.f32.mrb[0].mxu0
        %v648 = vpop.f32.mrb[0].mxu0
        %v649 = vpop.f32.mrb[0].mxu0
        %650 = vdwg.mxu0
        %v651 = vld [vmem:[%s5] sm:$0xf]
        %v652 = vld [vmem:[%s5 + $0x4] sm:$0xf]
        %v653 = vld [vmem:[%s5 + $0x8] sm:$0xf]
        %v654 = vld [vmem:[%s5 + $0xc] sm:$0xf]
        %v659 = vunpack.c.l.b16 %v651
        %v660 = vunpack.c.l.b16 %v652
        %v661 = vunpack.c.l.b16 %v653
        %v662 = vunpack.c.l.b16 %v654
        %v663 = vpack.c.b16 %v660, %v659
        %v664 = vpack.c.b16 %v662, %v661
        %667 = vmatprep.subr.bf16.mxu0 0
        %668 = vmatpush1.bf16.msra.mxu0 %v663
        %669 = vmatprep.subr.bf16.mxu0 0
        %670 = vmatpush1.bf16.msra.mxu0 %v664
        %671 = vmatprep.subr.bf16.mxu0 0
        %672 = vmatpush1.bf16.msra.mxu0 0
        %673 = vmatprep.subr.bf16.mxu0 0
        %674 = vmatpush1.bf16.msra.mxu0 0
        %675 = vmatprep.subr.bf16.mxu0 0
        %676 = vmatpush1.bf16.msra.mxu0 0
        %677 = vmatprep.subr.bf16.mxu0 0
        %678 = vmatpush1.bf16.msra.mxu0 0
        %679 = vmatprep.subr.bf16.mxu0 0
        %680 = vmatpush1.bf16.msra.mxu0 0
        %681 = vmatprep.subr.bf16.mxu0 0
        %682 = vmatpush1.bf16.msra.mxu0 0
        %683 = vmatprep.subr.bf16.mxu0 0
        %684 = vmatpush1.bf16.msra.mxu0 0
        %685 = vmatprep.subr.bf16.mxu0 0
        %686 = vmatpush1.bf16.msra.mxu0 0
        %687 = vmatprep.subr.bf16.mxu0 0
        %688 = vmatpush1.bf16.msra.mxu0 0
        %689 = vmatprep.subr.bf16.mxu0 0
        %690 = vmatpush1.bf16.msra.mxu0 0
        %691 = vmatprep.subr.bf16.mxu0 0
        %692 = vmatpush1.bf16.msra.mxu0 0
        %693 = vmatprep.subr.bf16.mxu0 0
        %694 = vmatpush1.bf16.msra.mxu0 0
        %695 = vmatprep.subr.bf16.mxu0 0
        %696 = vmatpush1.bf16.msra.mxu0 0
        %697 = vmatprep.subr.bf16.mxu0 0
        %698 = vmatpush1.bf16.msra.mxu0 0
        %699 = vmatprep.mubr.bf16.mxu0 0
        %700 = vmatmul.mubr.bf16.gmra.mrb[0].mxu0 %v552
        %v701 = vpop.f32.mrb[0].mxu0
        %v702 = vadd.f32 0.0, %v701
        %v703 = vpop.f32.mrb[0].mxu0
        %v704 = vpop.f32.mrb[0].mxu0
        %v705 = vpop.f32.mrb[0].mxu0
        %706 = vdwg.mxu0
        %708 = vrot.lane.b32.xlu0 %v594, 120
        %v709 = vpop.permute.xlu0 %708
        %711 = vrot.lane.b32.xlu0 %v594, 112
        %v712 = vpop.permute.xlu0 %711
        %714 = vrot.lane.b32.xlu0 %v594, 104
        %v715 = vpop.permute.xlu0 %714
        %v717 = vcombine.low %v594, %v712
        %v718 = vcombine.high %v594, %v712
        %v720 = vunpack.c.l.s4 1983009808
        %v721 = vunpack.c.0.s8 %v720
        %v722 = vlaneseq
        %v723 = vshrl.u32 %v722, 7
        %v724 = vsub.s32 %v721, %v723
        %v725 = vrot.slane %v717, %v724
        %v727 = vunpack.c.l.s4 1983009808
        %v728 = vunpack.c.0.s8 %v727
        %v729 = vlaneseq
        %v730 = vshrl.u32 %v729, 7
        %v731 = vsub.s32 %v728, %v730
        %v732 = vrot.slane %v718, %v731
        %v733 = vcombine.low %v709, %v715
        %v734 = vcombine.high %v709, %v715
        %v736 = vunpack.c.l.s4 1983009808
        %v737 = vunpack.c.0.s8 %v736
        %v738 = vlaneseq
        %v739 = vshrl.u32 %v738, 7
        %v740 = vsub.s32 %v737, %v739
        %v741 = vrot.slane %v733, %v740
        %v743 = vunpack.c.l.s4 1983009808
        %v744 = vunpack.c.0.s8 %v743
        %v745 = vlaneseq
        %v746 = vshrl.u32 %v745, 7
        %v747 = vsub.s32 %v744, %v746
        %v748 = vrot.slane %v734, %v747
        %v749 = vcombine.low %v725, %v741
        %v750 = vcombine.high %v725, %v741
        %v752 = vunpack.c.l.s4 1934713408
        %v753 = vunpack.c.0.s8 %v752
        %v754 = vlaneseq
        %v755 = vshrl.u32 %v754, 7
        %v756 = vsub.s32 %v753, %v755
        %v757 = vrot.slane %v749, %v756
        %v759 = vunpack.c.l.s4 1934713408
        %v760 = vunpack.c.0.s8 %v759
        %v761 = vlaneseq
        %v762 = vshrl.u32 %v761, 7
        %v763 = vsub.s32 %v760, %v762
        %v764 = vrot.slane %v750, %v763
        %v765 = vcombine.low %v732, %v748
        %v766 = vcombine.high %v732, %v748
        %v768 = vunpack.c.l.s4 1934713408
        %v769 = vunpack.c.0.s8 %v768
        %v770 = vlaneseq
        %v771 = vshrl.u32 %v770, 7
        %v772 = vsub.s32 %v769, %v771
        %v773 = vrot.slane %v765, %v772
        %v775 = vunpack.c.l.s4 1934713408
        %v776 = vunpack.c.0.s8 %v775
        %v777 = vlaneseq
        %v778 = vshrl.u32 %v777, 7
        %v779 = vsub.s32 %v776, %v778
        %v780 = vrot.slane %v766, %v779
        %v781 = vcombine.high %v757, 0.0
        %v782 = vcombine.high %v764, 0.0
        %v783 = vcombine.high %v773, 0.0
        %v784 = vcombine.high %v780, 0.0
        %v785 = vcombine.low %v757, %v764
        %v787 = vunpack.c.l.s4 1983009808
        %v788 = vunpack.c.0.s8 %v787
        %v789 = vlaneseq
        %v790 = vshrl.u32 %v789, 7
        %v791 = vsub.s32 %v788, %v790
        %v792 = vrot.slane %v785, %v791
        %v793 = vcombine.low %v781, %v782
        %v795 = vunpack.c.l.s4 1983009808
        %v796 = vunpack.c.0.s8 %v795
        %v797 = vlaneseq
        %v798 = vshrl.u32 %v797, 7
        %v799 = vsub.s32 %v796, %v798
        %v800 = vrot.slane %v793, %v799
        %v801 = vcombine.low %v773, %v780
        %v803 = vunpack.c.l.s4 1983009808
        %v804 = vunpack.c.0.s8 %v803
        %v805 = vlaneseq
        %v806 = vshrl.u32 %v805, 7
        %v807 = vsub.s32 %v804, %v806
        %v808 = vrot.slane %v801, %v807
        %v809 = vcombine.low %v783, %v784
        %v811 = vunpack.c.l.s4 1983009808
        %v812 = vunpack.c.0.s8 %v811
        %v813 = vlaneseq
        %v814 = vshrl.u32 %v813, 7
        %v815 = vsub.s32 %v812, %v814
        %v816 = vrot.slane %v809, %v815
        %v817 = vcombine.low %v792, %v800
        %v818 = vcombine.high %v792, %v800
        %v820 = vunpack.c.l.s4 1934713408
        %v821 = vunpack.c.0.s8 %v820
        %v822 = vlaneseq
        %v823 = vshrl.u32 %v822, 7
        %v824 = vsub.s32 %v821, %v823
        %v825 = vrot.slane %v817, %v824
        %v827 = vunpack.c.l.s4 1934713408
        %v828 = vunpack.c.0.s8 %v827
        %v829 = vlaneseq
        %v830 = vshrl.u32 %v829, 7
        %v831 = vsub.s32 %v828, %v830
        %v832 = vrot.slane %v818, %v831
        %v833 = vcombine.low %v808, %v816
        %v834 = vcombine.high %v808, %v816
        %v836 = vunpack.c.l.s4 1934713408
        %v837 = vunpack.c.0.s8 %v836
        %v838 = vlaneseq
        %v839 = vshrl.u32 %v838, 7
        %v840 = vsub.s32 %v837, %v839
        %v841 = vrot.slane %v833, %v840
        %v843 = vunpack.c.l.s4 1934713408
        %v844 = vunpack.c.0.s8 %v843
        %v845 = vlaneseq
        %v846 = vshrl.u32 %v845, 7
        %v847 = vsub.s32 %v844, %v846
        %v848 = vrot.slane %v834, %v847
        %v849 = vcombine.low %v825, %v841
        %v850 = vcombine.high %v825, %v841
        %v851 = vcombine.low %v832, %v848
        %v852 = vcombine.high %v832, %v848
        %854 = vrot.lane.b32.xlu0 %v646, 120
        %v855 = vpop.permute.xlu0 %854
        %857 = vrot.lane.b32.xlu0 %v646, 112
        %v858 = vpop.permute.xlu0 %857
        %860 = vrot.lane.b32.xlu0 %v646, 104
        %v861 = vpop.permute.xlu0 %860
        %v863 = vcombine.low %v646, %v858
        %v864 = vcombine.high %v646, %v858
        %v866 = vunpack.c.l.s4 1983009808
        %v867 = vunpack.c.0.s8 %v866
        %v868 = vlaneseq
        %v869 = vshrl.u32 %v868, 7
        %v870 = vsub.s32 %v867, %v869
        %v871 = vrot.slane %v863, %v870
        %v873 = vunpack.c.l.s4 1983009808
        %v874 = vunpack.c.0.s8 %v873
        %v875 = vlaneseq
        %v876 = vshrl.u32 %v875, 7
        %v877 = vsub.s32 %v874, %v876
        %v878 = vrot.slane %v864, %v877
        %v879 = vcombine.low %v855, %v861
        %v880 = vcombine.high %v855, %v861
        %v882 = vunpack.c.l.s4 1983009808
        %v883 = vunpack.c.0.s8 %v882
        %v884 = vlaneseq
        %v885 = vshrl.u32 %v884, 7
        %v886 = vsub.s32 %v883, %v885
        %v887 = vrot.slane %v879, %v886
        %v889 = vunpack.c.l.s4 1983009808
        %v890 = vunpack.c.0.s8 %v889
        %v891 = vlaneseq
        %v892 = vshrl.u32 %v891, 7
        %v893 = vsub.s32 %v890, %v892
        %v894 = vrot.slane %v880, %v893
        %v895 = vcombine.low %v871, %v887
        %v896 = vcombine.high %v871, %v887
        %v898 = vunpack.c.l.s4 1934713408
        %v899 = vunpack.c.0.s8 %v898
        %v900 = vlaneseq
        %v901 = vshrl.u32 %v900, 7
        %v902 = vsub.s32 %v899, %v901
        %v903 = vrot.slane %v895, %v902
        %v905 = vunpack.c.l.s4 1934713408
        %v906 = vunpack.c.0.s8 %v905
        %v907 = vlaneseq
        %v908 = vshrl.u32 %v907, 7
        %v909 = vsub.s32 %v906, %v908
        %v910 = vrot.slane %v896, %v909
        %v911 = vcombine.low %v878, %v894
        %v912 = vcombine.high %v878, %v894
        %v914 = vunpack.c.l.s4 1934713408
        %v915 = vunpack.c.0.s8 %v914
        %v916 = vlaneseq
        %v917 = vshrl.u32 %v916, 7
        %v918 = vsub.s32 %v915, %v917
        %v919 = vrot.slane %v911, %v918
        %v921 = vunpack.c.l.s4 1934713408
        %v922 = vunpack.c.0.s8 %v921
        %v923 = vlaneseq
        %v924 = vshrl.u32 %v923, 7
        %v925 = vsub.s32 %v922, %v924
        %v926 = vrot.slane %v912, %v925
        %v927 = vcombine.high %v903, 0.0
        %v928 = vcombine.high %v910, 0.0
        %v929 = vcombine.high %v919, 0.0
        %v930 = vcombine.high %v926, 0.0
        %v931 = vcombine.low %v903, %v910
        %v933 = vunpack.c.l.s4 1983009808
        %v934 = vunpack.c.0.s8 %v933
        %v935 = vlaneseq
        %v936 = vshrl.u32 %v935, 7
        %v937 = vsub.s32 %v934, %v936
        %v938 = vrot.slane %v931, %v937
        %v939 = vcombine.low %v927, %v928
        %v941 = vunpack.c.l.s4 1983009808
        %v942 = vunpack.c.0.s8 %v941
        %v943 = vlaneseq
        %v944 = vshrl.u32 %v943, 7
        %v945 = vsub.s32 %v942, %v944
        %v946 = vrot.slane %v939, %v945
        %v947 = vcombine.low %v919, %v926
        %v949 = vunpack.c.l.s4 1983009808
        %v950 = vunpack.c.0.s8 %v949
        %v951 = vlaneseq
        %v952 = vshrl.u32 %v951, 7
        %v953 = vsub.s32 %v950, %v952
        %v954 = vrot.slane %v947, %v953
        %v955 = vcombine.low %v929, %v930
        %v957 = vunpack.c.l.s4 1983009808
        %v958 = vunpack.c.0.s8 %v957
        %v959 = vlaneseq
        %v960 = vshrl.u32 %v959, 7
        %v961 = vsub.s32 %v958, %v960
        %v962 = vrot.slane %v955, %v961
        %v963 = vcombine.low %v938, %v946
        %v964 = vcombine.high %v938, %v946
        %v966 = vunpack.c.l.s4 1934713408
        %v967 = vunpack.c.0.s8 %v966
        %v968 = vlaneseq
        %v969 = vshrl.u32 %v968, 7
        %v970 = vsub.s32 %v967, %v969
        %v971 = vrot.slane %v963, %v970
        %v973 = vunpack.c.l.s4 1934713408
        %v974 = vunpack.c.0.s8 %v973
        %v975 = vlaneseq
        %v976 = vshrl.u32 %v975, 7
        %v977 = vsub.s32 %v974, %v976
        %v978 = vrot.slane %v964, %v977
        %v979 = vcombine.low %v954, %v962
        %v980 = vcombine.high %v954, %v962
        %v982 = vunpack.c.l.s4 1934713408
        %v983 = vunpack.c.0.s8 %v982
        %v984 = vlaneseq
        %v985 = vshrl.u32 %v984, 7
        %v986 = vsub.s32 %v983, %v985
        %v987 = vrot.slane %v979, %v986
        %v989 = vunpack.c.l.s4 1934713408
        %v990 = vunpack.c.0.s8 %v989
        %v991 = vlaneseq
        %v992 = vshrl.u32 %v991, 7
        %v993 = vsub.s32 %v990, %v992
        %v994 = vrot.slane %v980, %v993
        %v995 = vcombine.low %v971, %v987
        %v996 = vcombine.high %v971, %v987
        %v997 = vcombine.low %v978, %v994
        %v998 = vcombine.high %v978, %v994
        %1000 = vrot.lane.b32.xlu0 %v702, 120
        %v1001 = vpop.permute.xlu0 %1000
        %1003 = vrot.lane.b32.xlu0 %v702, 112
        %v1004 = vpop.permute.xlu0 %1003
        %1006 = vrot.lane.b32.xlu0 %v702, 104
        %v1007 = vpop.permute.xlu0 %1006
        %v1009 = vcombine.low %v702, %v1004
        %v1010 = vcombine.high %v702, %v1004
        %v1012 = vunpack.c.l.s4 1983009808
        %v1013 = vunpack.c.0.s8 %v1012
        %v1014 = vlaneseq
        %v1015 = vshrl.u32 %v1014, 7
        %v1016 = vsub.s32 %v1013, %v1015
        %v1017 = vrot.slane %v1009, %v1016
        %v1019 = vunpack.c.l.s4 1983009808
        %v1020 = vunpack.c.0.s8 %v1019
        %v1021 = vlaneseq
        %v1022 = vshrl.u32 %v1021, 7
        %v1023 = vsub.s32 %v1020, %v1022
        %v1024 = vrot.slane %v1010, %v1023
        %v1025 = vcombine.low %v1001, %v1007
        %v1026 = vcombine.high %v1001, %v1007
        %v1028 = vunpack.c.l.s4 1983009808
        %v1029 = vunpack.c.0.s8 %v1028
        %v1030 = vlaneseq
        %v1031 = vshrl.u32 %v1030, 7
        %v1032 = vsub.s32 %v1029, %v1031
        %v1033 = vrot.slane %v1025, %v1032
        %v1035 = vunpack.c.l.s4 1983009808
        %v1036 = vunpack.c.0.s8 %v1035
        %v1037 = vlaneseq
        %v1038 = vshrl.u32 %v1037, 7
        %v1039 = vsub.s32 %v1036, %v1038
        %v1040 = vrot.slane %v1026, %v1039
        %v1041 = vcombine.low %v1017, %v1033
        %v1042 = vcombine.high %v1017, %v1033
        %v1044 = vunpack.c.l.s4 1934713408
        %v1045 = vunpack.c.0.s8 %v1044
        %v1046 = vlaneseq
        %v1047 = vshrl.u32 %v1046, 7
        %v1048 = vsub.s32 %v1045, %v1047
        %v1049 = vrot.slane %v1041, %v1048
        %v1051 = vunpack.c.l.s4 1934713408
        %v1052 = vunpack.c.0.s8 %v1051
        %v1053 = vlaneseq
        %v1054 = vshrl.u32 %v1053, 7
        %v1055 = vsub.s32 %v1052, %v1054
        %v1056 = vrot.slane %v1042, %v1055
        %v1057 = vcombine.low %v1024, %v1040
        %v1058 = vcombine.high %v1024, %v1040
        %v1060 = vunpack.c.l.s4 1934713408
        %v1061 = vunpack.c.0.s8 %v1060
        %v1062 = vlaneseq
        %v1063 = vshrl.u32 %v1062, 7
        %v1064 = vsub.s32 %v1061, %v1063
        %v1065 = vrot.slane %v1057, %v1064
        %v1067 = vunpack.c.l.s4 1934713408
        %v1068 = vunpack.c.0.s8 %v1067
        %v1069 = vlaneseq
        %v1070 = vshrl.u32 %v1069, 7
        %v1071 = vsub.s32 %v1068, %v1070
        %v1072 = vrot.slane %v1058, %v1071
        %v1073 = vcombine.high %v1049, 0.0
        %v1074 = vcombine.high %v1056, 0.0
        %v1075 = vcombine.high %v1065, 0.0
        %v1076 = vcombine.high %v1072, 0.0
        %v1077 = vcombine.low %v1049, %v1056
        %v1079 = vunpack.c.l.s4 1983009808
        %v1080 = vunpack.c.0.s8 %v1079
        %v1081 = vlaneseq
        %v1082 = vshrl.u32 %v1081, 7
        %v1083 = vsub.s32 %v1080, %v1082
        %v1084 = vrot.slane %v1077, %v1083
        %v1085 = vcombine.low %v1073, %v1074
        %v1087 = vunpack.c.l.s4 1983009808
        %v1088 = vunpack.c.0.s8 %v1087
        %v1089 = vlaneseq
        %v1090 = vshrl.u32 %v1089, 7
        %v1091 = vsub.s32 %v1088, %v1090
        %v1092 = vrot.slane %v1085, %v1091
        %v1093 = vcombine.low %v1065, %v1072
        %v1095 = vunpack.c.l.s4 1983009808
        %v1096 = vunpack.c.0.s8 %v1095
        %v1097 = vlaneseq
        %v1098 = vshrl.u32 %v1097, 7
        %v1099 = vsub.s32 %v1096, %v1098
        %v1100 = vrot.slane %v1093, %v1099
        %v1101 = vcombine.low %v1075, %v1076
        %v1103 = vunpack.c.l.s4 1983009808
        %v1104 = vunpack.c.0.s8 %v1103
        %v1105 = vlaneseq
        %v1106 = vshrl.u32 %v1105, 7
        %v1107 = vsub.s32 %v1104, %v1106
        %v1108 = vrot.slane %v1101, %v1107
        %v1109 = vcombine.low %v1084, %v1092
        %v1110 = vcombine.high %v1084, %v1092
        %v1112 = vunpack.c.l.s4 1934713408
        %v1113 = vunpack.c.0.s8 %v1112
        %v1114 = vlaneseq
        %v1115 = vshrl.u32 %v1114, 7
        %v1116 = vsub.s32 %v1113, %v1115
        %v1117 = vrot.slane %v1109, %v1116
        %v1119 = vunpack.c.l.s4 1934713408
        %v1120 = vunpack.c.0.s8 %v1119
        %v1121 = vlaneseq
        %v1122 = vshrl.u32 %v1121, 7
        %v1123 = vsub.s32 %v1120, %v1122
        %v1124 = vrot.slane %v1110, %v1123
        %v1125 = vcombine.low %v1100, %v1108
        %v1126 = vcombine.high %v1100, %v1108
        %v1128 = vunpack.c.l.s4 1934713408
        %v1129 = vunpack.c.0.s8 %v1128
        %v1130 = vlaneseq
        %v1131 = vshrl.u32 %v1130, 7
        %v1132 = vsub.s32 %v1129, %v1131
        %v1133 = vrot.slane %v1125, %v1132
        %v1135 = vunpack.c.l.s4 1934713408
        %v1136 = vunpack.c.0.s8 %v1135
        %v1137 = vlaneseq
        %v1138 = vshrl.u32 %v1137, 7
        %v1139 = vsub.s32 %v1136, %v1138
        %v1140 = vrot.slane %v1126, %v1139
        %v1141 = vcombine.low %v1117, %v1133
        %v1142 = vcombine.high %v1117, %v1133
        %v1143 = vcombine.low %v1124, %v1140
        %v1144 = vcombine.high %v1124, %v1140
        %v1145 = vpack.c.bf16 %v849, %v849
        %v1146 = vpack.c.bf16 %v850, %v850
        %v1147 = vpack.c.bf16 %v851, %v851
        %v1148 = vpack.c.bf16 %v852, %v852
        %v1149 = vpack.c.bf16 %v995, %v995
        %v1150 = vpack.c.bf16 %v996, %v996
        %v1151 = vpack.c.bf16 %v997, %v997
        %v1152 = vpack.c.bf16 %v998, %v998
        %vm1153 = vcmask 64512
        %v1155 = vsel %vm1153, %v1145, 0
        %v1158 = vsel %vm1153, %v1149, 0
        %1160 = vmatprep.subr.bf16.mxu0 0
        %1161 = vmatpush1.bf16.xpose.msra.mxu0 %v1158
        %1162 = vmatprep.subr.bf16.mxu0 0
        %1163 = vmatpush1.bf16.xpose.msra.mxu0 0
        %1164 = vmatprep.subr.bf16.mxu0 0
        %1165 = vmatpush1.bf16.xpose.msra.mxu0 0
        %1166 = vmatprep.subr.bf16.mxu0 0
        %1167 = vmatpush1.bf16.xpose.msra.mxu0 0
        %1168 = vmatprep.subr.bf16.mxu0 0
        %1169 = vmatpush1.bf16.xpose.msra.mxu0 0
        %1170 = vmatprep.subr.bf16.mxu0 0
        %1171 = vmatpush1.bf16.xpose.msra.mxu0 0
        %1172 = vmatprep.subr.bf16.mxu0 0
        %1173 = vmatpush1.bf16.xpose.msra.mxu0 0
        %1174 = vmatprep.subr.bf16.mxu0 0
        %1175 = vmatpush1.bf16.xpose.msra.mxu0 0
        %1176 = vmatprep.subr.bf16.mxu0 0
        %1177 = vmatpush1.bf16.xpose.msra.mxu0 0
        %1178 = vmatprep.subr.bf16.mxu0 0
        %1179 = vmatpush1.bf16.xpose.msra.mxu0 0
        %1180 = vmatprep.subr.bf16.mxu0 0
        %1181 = vmatpush1.bf16.xpose.msra.mxu0 0
        %1182 = vmatprep.subr.bf16.mxu0 0
        %1183 = vmatpush1.bf16.xpose.msra.mxu0 0
        %1184 = vmatprep.subr.bf16.mxu0 0
        %1185 = vmatpush1.bf16.xpose.msra.mxu0 0
        %1186 = vmatprep.subr.bf16.mxu0 0
        %1187 = vmatpush1.bf16.xpose.msra.mxu0 0
        %1188 = vmatprep.subr.bf16.mxu0 0
        %1189 = vmatpush1.bf16.xpose.msra.mxu0 0
        %1190 = vmatprep.subr.bf16.mxu0 0
        %1191 = vmatpush1.bf16.xpose.msra.mxu0 0
        %1192 = vmatprep.mubr.bf16.mxu0 0
        %1193 = vmatmul.mubr.bf16.gmra.mrb[0].mxu0 %v1155
        %v1194 = vpop.f32.mrb[0].mxu0
        %v1195 = vadd.f32 0.0, %v1194
        %v1196 = vpop.f32.mrb[0].mxu0
        %v1197 = vpop.f32.mrb[0].mxu0
        %v1198 = vpop.f32.mrb[0].mxu0
        %1199 = vdwg.mxu0
        %v1201 = vsel %vm1153, %v1146, 0
        %v1204 = vsel %vm1153, %v1150, 0
        %1206 = vmatprep.subr.bf16.mxu0 0
        %1207 = vmatpush1.bf16.xpose.msra.mxu0 %v1204
        %1208 = vmatprep.subr.bf16.mxu0 0
        %1209 = vmatpush1.bf16.xpose.msra.mxu0 0
        %1210 = vmatprep.subr.bf16.mxu0 0
        %1211 = vmatpush1.bf16.xpose.msra.mxu0 0
        %1212 = vmatprep.subr.bf16.mxu0 0
        %1213 = vmatpush1.bf16.xpose.msra.mxu0 0
        %1214 = vmatprep.subr.bf16.mxu0 0
        %1215 = vmatpush1.bf16.xpose.msra.mxu0 0
        %1216 = vmatprep.subr.bf16.mxu0 0
        %1217 = vmatpush1.bf16.xpose.msra.mxu0 0
        %1218 = vmatprep.subr.bf16.mxu0 0
        %1219 = vmatpush1.bf16.xpose.msra.mxu0 0
        %1220 = vmatprep.subr.bf16.mxu0 0
        %1221 = vmatpush1.bf16.xpose.msra.mxu0 0
        %1222 = vmatprep.subr.bf16.mxu0 0
        %1223 = vmatpush1.bf16.xpose.msra.mxu0 0
        %1224 = vmatprep.subr.bf16.mxu0 0
        %1225 = vmatpush1.bf16.xpose.msra.mxu0 0
        %1226 = vmatprep.subr.bf16.mxu0 0
        %1227 = vmatpush1.bf16.xpose.msra.mxu0 0
        %1228 = vmatprep.subr.bf16.mxu0 0
        %1229 = vmatpush1.bf16.xpose.msra.mxu0 0
        %1230 = vmatprep.subr.bf16.mxu0 0
        %1231 = vmatpush1.bf16.xpose.msra.mxu0 0
        %1232 = vmatprep.subr.bf16.mxu0 0
        %1233 = vmatpush1.bf16.xpose.msra.mxu0 0
        %1234 = vmatprep.subr.bf16.mxu0 0
        %1235 = vmatpush1.bf16.xpose.msra.mxu0 0
        %1236 = vmatprep.subr.bf16.mxu0 0
        %1237 = vmatpush1.bf16.xpose.msra.mxu0 0
        %1238 = vmatprep.mubr.bf16.mxu0 0
        %1239 = vmatmul.mubr.bf16.gmra.mrb[0].mxu0 %v1201
        %v1240 = vpop.f32.mrb[0].mxu0
        %v1241 = vadd.f32 0.0, %v1240
        %v1242 = vpop.f32.mrb[0].mxu0
        %v1243 = vpop.f32.mrb[0].mxu0
        %v1244 = vpop.f32.mrb[0].mxu0
        %1245 = vdwg.mxu0
        %v1247 = vsel %vm1153, %v1147, 0
        %v1250 = vsel %vm1153, %v1151, 0
        %1252 = vmatprep.subr.bf16.mxu0 0
        %1253 = vmatpush1.bf16.xpose.msra.mxu0 %v1250
        %1254 = vmatprep.subr.bf16.mxu0 0
        %1255 = vmatpush1.bf16.xpose.msra.mxu0 0
        %1256 = vmatprep.subr.bf16.mxu0 0
        %1257 = vmatpush1.bf16.xpose.msra.mxu0 0
        %1258 = vmatprep.subr.bf16.mxu0 0
        %1259 = vmatpush1.bf16.xpose.msra.mxu0 0
        %1260 = vmatprep.subr.bf16.mxu0 0
        %1261 = vmatpush1.bf16.xpose.msra.mxu0 0
        %1262 = vmatprep.subr.bf16.mxu0 0
        %1263 = vmatpush1.bf16.xpose.msra.mxu0 0
        %1264 = vmatprep.subr.bf16.mxu0 0
        %1265 = vmatpush1.bf16.xpose.msra.mxu0 0
        %1266 = vmatprep.subr.bf16.mxu0 0
        %1267 = vmatpush1.bf16.xpose.msra.mxu0 0
        %1268 = vmatprep.subr.bf16.mxu0 0
        %1269 = vmatpush1.bf16.xpose.msra.mxu0 0
        %1270 = vmatprep.subr.bf16.mxu0 0
        %1271 = vmatpush1.bf16.xpose.msra.mxu0 0
        %1272 = vmatprep.subr.bf16.mxu0 0
        %1273 = vmatpush1.bf16.xpose.msra.mxu0 0
        %1274 = vmatprep.subr.bf16.mxu0 0
        %1275 = vmatpush1.bf16.xpose.msra.mxu0 0
        %1276 = vmatprep.subr.bf16.mxu0 0
        %1277 = vmatpush1.bf16.xpose.msra.mxu0 0
        %1278 = vmatprep.subr.bf16.mxu0 0
        %1279 = vmatpush1.bf16.xpose.msra.mxu0 0
        %1280 = vmatprep.subr.bf16.mxu0 0
        %1281 = vmatpush1.bf16.xpose.msra.mxu0 0
        %1282 = vmatprep.subr.bf16.mxu0 0
        %1283 = vmatpush1.bf16.xpose.msra.mxu0 0
        %1284 = vmatprep.mubr.bf16.mxu0 0
        %1285 = vmatmul.mubr.bf16.gmra.mrb[0].mxu0 %v1247
        %v1286 = vpop.f32.mrb[0].mxu0
        %v1287 = vadd.f32 0.0, %v1286
        %v1288 = vpop.f32.mrb[0].mxu0
        %v1289 = vpop.f32.mrb[0].mxu0
        %v1290 = vpop.f32.mrb[0].mxu0
        %1291 = vdwg.mxu0
        %v1293 = vsel %vm1153, %v1148, 0
        %v1296 = vsel %vm1153, %v1152, 0
        %1298 = vmatprep.subr.bf16.mxu0 0
        %1299 = vmatpush1.bf16.xpose.msra.mxu0 %v1296
        %1300 = vmatprep.subr.bf16.mxu0 0
        %1301 = vmatpush1.bf16.xpose.msra.mxu0 0
        %1302 = vmatprep.subr.bf16.mxu0 0
        %1303 = vmatpush1.bf16.xpose.msra.mxu0 0
        %1304 = vmatprep.subr.bf16.mxu0 0
        %1305 = vmatpush1.bf16.xpose.msra.mxu0 0
        %1306 = vmatprep.subr.bf16.mxu0 0
        %1307 = vmatpush1.bf16.xpose.msra.mxu0 0
        %1308 = vmatprep.subr.bf16.mxu0 0
        %1309 = vmatpush1.bf16.xpose.msra.mxu0 0
        %1310 = vmatprep.subr.bf16.mxu0 0
        %1311 = vmatpush1.bf16.xpose.msra.mxu0 0
        %1312 = vmatprep.subr.bf16.mxu0 0
        %1313 = vmatpush1.bf16.xpose.msra.mxu0 0
        %1314 = vmatprep.subr.bf16.mxu0 0
        %1315 = vmatpush1.bf16.xpose.msra.mxu0 0
        %1316 = vmatprep.subr.bf16.mxu0 0
        %1317 = vmatpush1.bf16.xpose.msra.mxu0 0
        %1318 = vmatprep.subr.bf16.mxu0 0
        %1319 = vmatpush1.bf16.xpose.msra.mxu0 0
        %1320 = vmatprep.subr.bf16.mxu0 0
        %1321 = vmatpush1.bf16.xpose.msra.mxu0 0
        %1322 = vmatprep.subr.bf16.mxu0 0
        %1323 = vmatpush1.bf16.xpose.msra.mxu0 0
        %1324 = vmatprep.subr.bf16.mxu0 0
        %1325 = vmatpush1.bf16.xpose.msra.mxu0 0
        %1326 = vmatprep.subr.bf16.mxu0 0
        %1327 = vmatpush1.bf16.xpose.msra.mxu0 0
        %1328 = vmatprep.subr.bf16.mxu0 0
        %1329 = vmatpush1.bf16.xpose.msra.mxu0 0
        %1330 = vmatprep.mubr.bf16.mxu0 0
        %1331 = vmatmul.mubr.bf16.gmra.mrb[0].mxu0 %v1293
        %v1332 = vpop.f32.mrb[0].mxu0
        %v1333 = vadd.f32 0.0, %v1332
        %v1334 = vpop.f32.mrb[0].mxu0
        %v1335 = vpop.f32.mrb[0].mxu0
        %v1336 = vpop.f32.mrb[0].mxu0
        %1337 = vdwg.mxu0
        %v1338 = vsel %vm1153, %v1195, -inf
        %1339 = vmax.xlane.f32.xlu0 %v1338
        %v1340 = vpop.xlane.xlu0 %1339
        %v1341 = vsel %vm1153, %v1241, -inf
        %1342 = vmax.xlane.f32.xlu0 %v1341
        %v1343 = vpop.xlane.xlu0 %1342
        %v1344 = vsel %vm1153, %v1287, -inf
        %1345 = vmax.xlane.f32.xlu0 %v1344
        %v1346 = vpop.xlane.xlu0 %1345
        %v1347 = vsel %vm1153, %v1333, -inf
        %1348 = vmax.xlane.f32.xlu0 %v1347
        %v1349 = vpop.xlane.xlu0 %1348
        %v1350 = vsub.f32 %v1195, %v1340
        %v1351 = vsub.f32 %v1241, %v1343
        %v1352 = vsub.f32 %v1287, %v1346
        %v1353 = vsub.f32 %v1333, %v1349
        %v1354 = vmul.f32 %v1350, 1.442695
        %v1355 = vpow.pop %v1354
        %v1356 = vmul.f32 %v1351, 1.442695
        %v1357 = vpow.pop %v1356
        %v1358 = vmul.f32 %v1352, 1.442695
        %v1359 = vpow.pop %v1358
        %v1360 = vmul.f32 %v1353, 1.442695
        %v1361 = vpow.pop %v1360
        %v1362 = vsel %vm1153, %v1355, 0.0
        %1363 = vadd.xlane.f32.xlu0 %v1362
        %v1364 = vpop.xlane.xlu0 %1363
        %v1365 = vsel %vm1153, %v1357, 0.0
        %1366 = vadd.xlane.f32.xlu0 %v1365
        %v1367 = vpop.xlane.xlu0 %1366
        %v1368 = vsel %vm1153, %v1359, 0.0
        %1369 = vadd.xlane.f32.xlu0 %v1368
        %v1370 = vpop.xlane.xlu0 %1369
        %v1371 = vsel %vm1153, %v1361, 0.0
        %1372 = vadd.xlane.f32.xlu0 %v1371
        %v1373 = vpop.xlane.xlu0 %1372
        %v1374 = vpack.c.bf16 %v1355, %v1355
        %v1375 = vpack.c.bf16 %v1357, %v1357
        %v1376 = vpack.c.bf16 %v1359, %v1359
        %v1377 = vpack.c.bf16 %v1361, %v1361
        %v1378 = vpack.c.bf16 %v1141, %v1141
        %v1379 = vpack.c.bf16 %v1142, %v1142
        %v1380 = vpack.c.bf16 %v1143, %v1143
        %v1381 = vpack.c.bf16 %v1144, %v1144
        %v1383 = vsel %vm1153, %v1374, 0
        %vm1385 = vcmask 1043456
        %v1387 = vsel %vm1385, %v1378, 0
        %1389 = vmatprep.subr.bf16.mxu0 0
        %1390 = vmatpush1.bf16.msra.mxu0 %v1387
        %1391 = vmatprep.subr.bf16.mxu0 0
        %1392 = vmatpush1.bf16.msra.mxu0 0
        %1393 = vmatprep.subr.bf16.mxu0 0
        %1394 = vmatpush1.bf16.msra.mxu0 0
        %1395 = vmatprep.subr.bf16.mxu0 0
        %1396 = vmatpush1.bf16.msra.mxu0 0
        %1397 = vmatprep.subr.bf16.mxu0 0
        %1398 = vmatpush1.bf16.msra.mxu0 0
        %1399 = vmatprep.subr.bf16.mxu0 0
        %1400 = vmatpush1.bf16.msra.mxu0 0
        %1401 = vmatprep.subr.bf16.mxu0 0
        %1402 = vmatpush1.bf16.msra.mxu0 0
        %1403 = vmatprep.subr.bf16.mxu0 0
        %1404 = vmatpush1.bf16.msra.mxu0 0
        %1405 = vmatprep.subr.bf16.mxu0 0
        %1406 = vmatpush1.bf16.msra.mxu0 0
        %1407 = vmatprep.subr.bf16.mxu0 0
        %1408 = vmatpush1.bf16.msra.mxu0 0
        %1409 = vmatprep.subr.bf16.mxu0 0
        %1410 = vmatpush1.bf16.msra.mxu0 0
        %1411 = vmatprep.subr.bf16.mxu0 0
        %1412 = vmatpush1.bf16.msra.mxu0 0
        %1413 = vmatprep.subr.bf16.mxu0 0
        %1414 = vmatpush1.bf16.msra.mxu0 0
        %1415 = vmatprep.subr.bf16.mxu0 0
        %1416 = vmatpush1.bf16.msra.mxu0 0
        %1417 = vmatprep.subr.bf16.mxu0 0
        %1418 = vmatpush1.bf16.msra.mxu0 0
        %1419 = vmatprep.subr.bf16.mxu0 0
        %1420 = vmatpush1.bf16.msra.mxu0 0
        %1421 = vmatprep.mubr.bf16.mxu0 0
        %1422 = vmatmul.mubr.bf16.gmra.mrb[0].mxu0 %v1383
        %v1423 = vpop.f32.mrb[0].mxu0
        %v1424 = vadd.f32 0.0, %v1423
        %v1425 = vpop.f32.mrb[0].mxu0
        %v1426 = vpop.f32.mrb[0].mxu0
        %v1427 = vpop.f32.mrb[0].mxu0
        %1428 = vdwg.mxu0
        %v1430 = vsel %vm1153, %v1375, 0
        %v1433 = vsel %vm1385, %v1379, 0
        %1435 = vmatprep.subr.bf16.mxu0 0
        %1436 = vmatpush1.bf16.msra.mxu0 %v1433
        %1437 = vmatprep.subr.bf16.mxu0 0
        %1438 = vmatpush1.bf16.msra.mxu0 0
        %1439 = vmatprep.subr.bf16.mxu0 0
        %1440 = vmatpush1.bf16.msra.mxu0 0
        %1441 = vmatprep.subr.bf16.mxu0 0
        %1442 = vmatpush1.bf16.msra.mxu0 0
        %1443 = vmatprep.subr.bf16.mxu0 0
        %1444 = vmatpush1.bf16.msra.mxu0 0
        %1445 = vmatprep.subr.bf16.mxu0 0
        %1446 = vmatpush1.bf16.msra.mxu0 0
        %1447 = vmatprep.subr.bf16.mxu0 0
        %1448 = vmatpush1.bf16.msra.mxu0 0
        %1449 = vmatprep.subr.bf16.mxu0 0
        %1450 = vmatpush1.bf16.msra.mxu0 0
        %1451 = vmatprep.subr.bf16.mxu0 0
        %1452 = vmatpush1.bf16.msra.mxu0 0
        %1453 = vmatprep.subr.bf16.mxu0 0
        %1454 = vmatpush1.bf16.msra.mxu0 0
        %1455 = vmatprep.subr.bf16.mxu0 0
        %1456 = vmatpush1.bf16.msra.mxu0 0
        %1457 = vmatprep.subr.bf16.mxu0 0
        %1458 = vmatpush1.bf16.msra.mxu0 0
        %1459 = vmatprep.subr.bf16.mxu0 0
        %1460 = vmatpush1.bf16.msra.mxu0 0
        %1461 = vmatprep.subr.bf16.mxu0 0
        %1462 = vmatpush1.bf16.msra.mxu0 0
        %1463 = vmatprep.subr.bf16.mxu0 0
        %1464 = vmatpush1.bf16.msra.mxu0 0
        %1465 = vmatprep.subr.bf16.mxu0 0
        %1466 = vmatpush1.bf16.msra.mxu0 0
        %1467 = vmatprep.mubr.bf16.mxu0 0
        %1468 = vmatmul.mubr.bf16.gmra.mrb[0].mxu0 %v1430
        %v1469 = vpop.f32.mrb[0].mxu0
        %v1470 = vadd.f32 0.0, %v1469
        %v1471 = vpop.f32.mrb[0].mxu0
        %v1472 = vpop.f32.mrb[0].mxu0
        %v1473 = vpop.f32.mrb[0].mxu0
        %1474 = vdwg.mxu0
        %v1476 = vsel %vm1153, %v1376, 0
        %v1479 = vsel %vm1385, %v1380, 0
        %1481 = vmatprep.subr.bf16.mxu0 0
        %1482 = vmatpush1.bf16.msra.mxu0 %v1479
        %1483 = vmatprep.subr.bf16.mxu0 0
        %1484 = vmatpush1.bf16.msra.mxu0 0
        %1485 = vmatprep.subr.bf16.mxu0 0
        %1486 = vmatpush1.bf16.msra.mxu0 0
        %1487 = vmatprep.subr.bf16.mxu0 0
        %1488 = vmatpush1.bf16.msra.mxu0 0
        %1489 = vmatprep.subr.bf16.mxu0 0
        %1490 = vmatpush1.bf16.msra.mxu0 0
        %1491 = vmatprep.subr.bf16.mxu0 0
        %1492 = vmatpush1.bf16.msra.mxu0 0
        %1493 = vmatprep.subr.bf16.mxu0 0
        %1494 = vmatpush1.bf16.msra.mxu0 0
        %1495 = vmatprep.subr.bf16.mxu0 0
        %1496 = vmatpush1.bf16.msra.mxu0 0
        %1497 = vmatprep.subr.bf16.mxu0 0
        %1498 = vmatpush1.bf16.msra.mxu0 0
        %1499 = vmatprep.subr.bf16.mxu0 0
        %1500 = vmatpush1.bf16.msra.mxu0 0
        %1501 = vmatprep.subr.bf16.mxu0 0
        %1502 = vmatpush1.bf16.msra.mxu0 0
        %1503 = vmatprep.subr.bf16.mxu0 0
        %1504 = vmatpush1.bf16.msra.mxu0 0
        %1505 = vmatprep.subr.bf16.mxu0 0
        %1506 = vmatpush1.bf16.msra.mxu0 0
        %1507 = vmatprep.subr.bf16.mxu0 0
        %1508 = vmatpush1.bf16.msra.mxu0 0
        %1509 = vmatprep.subr.bf16.mxu0 0
        %1510 = vmatpush1.bf16.msra.mxu0 0
        %1511 = vmatprep.subr.bf16.mxu0 0
        %1512 = vmatpush1.bf16.msra.mxu0 0
        %1513 = vmatprep.mubr.bf16.mxu0 0
        %1514 = vmatmul.mubr.bf16.gmra.mrb[0].mxu0 %v1476
        %v1515 = vpop.f32.mrb[0].mxu0
        %v1516 = vadd.f32 0.0, %v1515
        %v1517 = vpop.f32.mrb[0].mxu0
        %v1518 = vpop.f32.mrb[0].mxu0
        %v1519 = vpop.f32.mrb[0].mxu0
        %1520 = vdwg.mxu0
        %v1522 = vsel %vm1153, %v1377, 0
        %v1525 = vsel %vm1385, %v1381, 0
        %1527 = vmatprep.subr.bf16.mxu0 0
        %1528 = vmatpush1.bf16.msra.mxu0 %v1525
        %1529 = vmatprep.subr.bf16.mxu0 0
        %1530 = vmatpush1.bf16.msra.mxu0 0
        %1531 = vmatprep.subr.bf16.mxu0 0
        %1532 = vmatpush1.bf16.msra.mxu0 0
        %1533 = vmatprep.subr.bf16.mxu0 0
        %1534 = vmatpush1.bf16.msra.mxu0 0
        %1535 = vmatprep.subr.bf16.mxu0 0
        %1536 = vmatpush1.bf16.msra.mxu0 0
        %1537 = vmatprep.subr.bf16.mxu0 0
        %1538 = vmatpush1.bf16.msra.mxu0 0
        %1539 = vmatprep.subr.bf16.mxu0 0
        %1540 = vmatpush1.bf16.msra.mxu0 0
        %1541 = vmatprep.subr.bf16.mxu0 0
        %1542 = vmatpush1.bf16.msra.mxu0 0
        %1543 = vmatprep.subr.bf16.mxu0 0
        %1544 = vmatpush1.bf16.msra.mxu0 0
        %1545 = vmatprep.subr.bf16.mxu0 0
        %1546 = vmatpush1.bf16.msra.mxu0 0
        %1547 = vmatprep.subr.bf16.mxu0 0
        %1548 = vmatpush1.bf16.msra.mxu0 0
        %1549 = vmatprep.subr.bf16.mxu0 0
        %1550 = vmatpush1.bf16.msra.mxu0 0
        %1551 = vmatprep.subr.bf16.mxu0 0
        %1552 = vmatpush1.bf16.msra.mxu0 0
        %1553 = vmatprep.subr.bf16.mxu0 0
        %1554 = vmatpush1.bf16.msra.mxu0 0
        %1555 = vmatprep.subr.bf16.mxu0 0
        %1556 = vmatpush1.bf16.msra.mxu0 0
        %1557 = vmatprep.subr.bf16.mxu0 0
        %1558 = vmatpush1.bf16.msra.mxu0 0
        %1559 = vmatprep.mubr.bf16.mxu0 0
        %1560 = vmatmul.mubr.bf16.gmra.mrb[0].mxu0 %v1522
        %v1561 = vpop.f32.mrb[0].mxu0
        %v1562 = vadd.f32 0.0, %v1561
        %v1563 = vpop.f32.mrb[0].mxu0
        %v1564 = vpop.f32.mrb[0].mxu0
        %v1565 = vpop.f32.mrb[0].mxu0
        %1566 = vdwg.mxu0
        %v1567 = vrcp.pop %v1364
        %v1568 = vrcp.pop %v1367
        %v1569 = vrcp.pop %v1370
        %v1570 = vrcp.pop %v1373
        %v1571 = vmul.f32 %v1424, %v1567
        %v1572 = vmul.f32 %v1470, %v1568
        %v1573 = vmul.f32 %v1516, %v1569
        %v1574 = vmul.f32 %v1562, %v1570
        %v1575 = vcombine.low %v1571, %v1573
        %v1576 = vcombine.high %v1571, %v1573
        %v1578 = vunpack.c.l.s4 1983009808
        %v1579 = vunpack.c.0.s8 %v1578
        %v1580 = vlaneseq
        %v1581 = vshrl.u32 %v1580, 7
        %v1582 = vsub.s32 %v1579, %v1581
        %v1583 = vrot.slane %v1575, %v1582
        %v1585 = vunpack.c.l.s4 1983009808
        %v1586 = vunpack.c.0.s8 %v1585
        %v1587 = vlaneseq
        %v1588 = vshrl.u32 %v1587, 7
        %v1589 = vsub.s32 %v1586, %v1588
        %v1590 = vrot.slane %v1576, %v1589
        %v1591 = vcombine.low %v1572, %v1574
        %v1592 = vcombine.high %v1572, %v1574
        %v1594 = vunpack.c.l.s4 1983009808
        %v1595 = vunpack.c.0.s8 %v1594
        %v1596 = vlaneseq
        %v1597 = vshrl.u32 %v1596, 7
        %v1598 = vsub.s32 %v1595, %v1597
        %v1599 = vrot.slane %v1591, %v1598
        %v1601 = vunpack.c.l.s4 1983009808
        %v1602 = vunpack.c.0.s8 %v1601
        %v1603 = vlaneseq
        %v1604 = vshrl.u32 %v1603, 7
        %v1605 = vsub.s32 %v1602, %v1604
        %v1606 = vrot.slane %v1592, %v1605
        %v1607 = vcombine.low %v1583, %v1599
        %v1608 = vcombine.high %v1583, %v1599
        %v1610 = vunpack.c.l.s4 1934713408
        %v1611 = vunpack.c.0.s8 %v1610
        %v1612 = vlaneseq
        %v1613 = vshrl.u32 %v1612, 7
        %v1614 = vsub.s32 %v1611, %v1613
        %v1615 = vrot.slane %v1607, %v1614
        %v1617 = vunpack.c.l.s4 1934713408
        %v1618 = vunpack.c.0.s8 %v1617
        %v1619 = vlaneseq
        %v1620 = vshrl.u32 %v1619, 7
        %v1621 = vsub.s32 %v1618, %v1620
        %v1622 = vrot.slane %v1608, %v1621
        %v1623 = vcombine.low %v1590, %v1606
        %v1624 = vcombine.high %v1590, %v1606
        %v1626 = vunpack.c.l.s4 1934713408
        %v1627 = vunpack.c.0.s8 %v1626
        %v1628 = vlaneseq
        %v1629 = vshrl.u32 %v1628, 7
        %v1630 = vsub.s32 %v1627, %v1629
        %v1631 = vrot.slane %v1623, %v1630
        %v1633 = vunpack.c.l.s4 1934713408
        %v1634 = vunpack.c.0.s8 %v1633
        %v1635 = vlaneseq
        %v1636 = vshrl.u32 %v1635, 7
        %v1637 = vsub.s32 %v1634, %v1636
        %v1638 = vrot.slane %v1624, %v1637
        %v1639 = vcombine.high %v1615, 0.0
        %v1640 = vcombine.high %v1622, 0.0
        %v1641 = vcombine.high %v1631, 0.0
        %v1642 = vcombine.high %v1638, 0.0
        %v1643 = vcombine.low %v1615, %v1622
        %v1645 = vunpack.c.l.s4 1983009808
        %v1646 = vunpack.c.0.s8 %v1645
        %v1647 = vlaneseq
        %v1648 = vshrl.u32 %v1647, 7
        %v1649 = vsub.s32 %v1646, %v1648
        %v1650 = vrot.slane %v1643, %v1649
        %v1651 = vcombine.low %v1639, %v1640
        %v1653 = vunpack.c.l.s4 1983009808
        %v1654 = vunpack.c.0.s8 %v1653
        %v1655 = vlaneseq
        %v1656 = vshrl.u32 %v1655, 7
        %v1657 = vsub.s32 %v1654, %v1656
        %v1658 = vrot.slane %v1651, %v1657
        %v1659 = vcombine.low %v1631, %v1638
        %v1661 = vunpack.c.l.s4 1983009808
        %v1662 = vunpack.c.0.s8 %v1661
        %v1663 = vlaneseq
        %v1664 = vshrl.u32 %v1663, 7
        %v1665 = vsub.s32 %v1662, %v1664
        %v1666 = vrot.slane %v1659, %v1665
        %v1667 = vcombine.low %v1641, %v1642
        %v1669 = vunpack.c.l.s4 1983009808
        %v1670 = vunpack.c.0.s8 %v1669
        %v1671 = vlaneseq
        %v1672 = vshrl.u32 %v1671, 7
        %v1673 = vsub.s32 %v1670, %v1672
        %v1674 = vrot.slane %v1667, %v1673
        %v1675 = vcombine.low %v1650, %v1658
        %v1676 = vcombine.high %v1650, %v1658
        %v1678 = vunpack.c.l.s4 1934713408
        %v1679 = vunpack.c.0.s8 %v1678
        %v1680 = vlaneseq
        %v1681 = vshrl.u32 %v1680, 7
        %v1682 = vsub.s32 %v1679, %v1681
        %v1683 = vrot.slane %v1675, %v1682
        %v1685 = vunpack.c.l.s4 1934713408
        %v1686 = vunpack.c.0.s8 %v1685
        %v1687 = vlaneseq
        %v1688 = vshrl.u32 %v1687, 7
        %v1689 = vsub.s32 %v1686, %v1688
        %v1690 = vrot.slane %v1676, %v1689
        %v1691 = vcombine.low %v1666, %v1674
        %v1692 = vcombine.high %v1666, %v1674
        %v1694 = vunpack.c.l.s4 1934713408
        %v1695 = vunpack.c.0.s8 %v1694
        %v1696 = vlaneseq
        %v1697 = vshrl.u32 %v1696, 7
        %v1698 = vsub.s32 %v1695, %v1697
        %v1699 = vrot.slane %v1691, %v1698
        %v1701 = vunpack.c.l.s4 1934713408
        %v1702 = vunpack.c.0.s8 %v1701
        %v1703 = vlaneseq
        %v1704 = vshrl.u32 %v1703, 7
        %v1705 = vsub.s32 %v1702, %v1704
        %v1706 = vrot.slane %v1692, %v1705
        %v1707 = vcombine.low %v1683, %v1699
        %v1708 = vcombine.high %v1683, %v1699
        %v1709 = vcombine.low %v1690, %v1706
        %v1710 = vcombine.high %v1690, %v1706
        %1712 = vrot.lane.b32.xlu0 %v1708, 8
        %v1713 = vpop.permute.xlu0 %1712
        %1716 = vrot.lane.b32.xlu0 %v1709, 16
        %v1717 = vpop.permute.xlu0 %1716
        %1720 = vrot.lane.b32.xlu0 %v1710, 24
        %v1721 = vpop.permute.xlu0 %1720
        %v1723 = vsel %vm1153, %v1707, %v1713
        %vm1724 = vcmask 130048
        %v1725 = vsel %vm1724, %v1723, %v1717
        %vm1726 = vcmask 195584
        %v1727 = vsel %vm1726, %v1725, %v1721
        %v1728 = vpack.c.bf16 %v1727, %v1727
        %v1729 = vld [vmem:[%s6] sm:$0xf]
        %v1730 = vld [vmem:[%s6 + $0x4] sm:$0xf]
        %v1731 = vld [vmem:[%s6 + $0x8] sm:$0xf]
        %v1732 = vld [vmem:[%s6 + $0xc] sm:$0xf]
        %v1733 = vld [vmem:[#allocation2] sm:$0x1]
        %v1735 = vlaneseq
        %v1736 = vshrl.u32 %v1735, 7
        %v1737 = vsub.s32 0, %v1736
        %v1738 = vrot.slane %v1733, %v1737
        %v1744 = vunpack.c.l.b16 %v1729
        %v1745 = vunpack.c.l.b16 %v1730
        %v1746 = vunpack.c.l.b16 %v1731
        %v1747 = vunpack.c.l.b16 %v1732
        %v1748 = vpack.c.b16 %v1745, %v1744
        %v1749 = vpack.c.b16 %v1747, %v1746
        %v1753 = vsel %vm505, %v1728, 0
        %1755 = vmatprep.subr.bf16.mxu0 0
        %1756 = vmatpush1.bf16.msra.mxu0 %v1748
        %1757 = vmatprep.subr.bf16.mxu0 0
        %1758 = vmatpush1.bf16.msra.mxu0 %v1749
        %1759 = vmatprep.subr.bf16.mxu0 0
        %1760 = vmatpush1.bf16.msra.mxu0 0
        %1761 = vmatprep.subr.bf16.mxu0 0
        %1762 = vmatpush1.bf16.msra.mxu0 0
        %1763 = vmatprep.subr.bf16.mxu0 0
        %1764 = vmatpush1.bf16.msra.mxu0 0
        %1765 = vmatprep.subr.bf16.mxu0 0
        %1766 = vmatpush1.bf16.msra.mxu0 0
        %1767 = vmatprep.subr.bf16.mxu0 0
        %1768 = vmatpush1.bf16.msra.mxu0 0
        %1769 = vmatprep.subr.bf16.mxu0 0
        %1770 = vmatpush1.bf16.msra.mxu0 0
        %1771 = vmatprep.subr.bf16.mxu0 0
        %1772 = vmatpush1.bf16.msra.mxu0 0
        %1773 = vmatprep.subr.bf16.mxu0 0
        %1774 = vmatpush1.bf16.msra.mxu0 0
        %1775 = vmatprep.subr.bf16.mxu0 0
        %1776 = vmatpush1.bf16.msra.mxu0 0
        %1777 = vmatprep.subr.bf16.mxu0 0
        %1778 = vmatpush1.bf16.msra.mxu0 0
        %1779 = vmatprep.subr.bf16.mxu0 0
        %1780 = vmatpush1.bf16.msra.mxu0 0
        %1781 = vmatprep.subr.bf16.mxu0 0
        %1782 = vmatpush1.bf16.msra.mxu0 0
        %1783 = vmatprep.subr.bf16.mxu0 0
        %1784 = vmatpush1.bf16.msra.mxu0 0
        %1785 = vmatprep.subr.bf16.mxu0 0
        %1786 = vmatpush1.bf16.msra.mxu0 0
        %1787 = vmatprep.mubr.bf16.mxu0 0
        %1788 = vmatmul.mubr.bf16.gmra.mrb[0].mxu0 %v1753
        %v1789 = vpop.f32.mrb[0].mxu0
        %v1790 = vadd.f32 %v1738, %v1789
        %v1791 = vpop.f32.mrb[0].mxu0
        %v1792 = vpop.f32.mrb[0].mxu0
        %v1793 = vpop.f32.mrb[0].mxu0
        %1794 = vdwg.mxu0
        %v1795 = vadd.f32 %v502, %v1790
        %v1796 = vld [vmem:[#allocation5] sm:$0x1]
        %v1797 = vld [vmem:[#allocation7] sm:$0x1]
        %v1798 = vsel %vm505, %v1795, 0.0
        %1799 = vadd.xlane.f32.xlu0 %v1798
        %v1800 = vpop.xlane.xlu0 %1799
        %v1801 = vmul.f32 %v1800, %v509
        %v1802 = vsub.f32 %v1795, %v1801
        %v1803 = vmul.f32 %v1802, %v1802
        %v1804 = vsel %vm505, %v1803, 0.0
        %1805 = vadd.xlane.f32.xlu0 %v1804
        %v1806 = vpop.xlane.xlu0 %1805
        %v1807 = vmul.f32 %v1806, %v509
        %v1808 = vadd.f32 %v1807, 1e-05
        %v1809 = vrsqrt.pop %v1808
        %v1810 = vmul.f32 %v1802, %v1809
        %v1812 = vlaneseq
        %v1813 = vshrl.u32 %v1812, 7
        %v1814 = vsub.s32 0, %v1813
        %v1815 = vrot.slane %v1796, %v1814
        %v1817 = vmul.f32 %v1810, %v1815
        %v1819 = vlaneseq
        %v1820 = vshrl.u32 %v1819, 7
        %v1821 = vsub.s32 0, %v1820
        %v1822 = vrot.slane %v1797, %v1821
        %v1824 = vadd.f32 %v1817, %v1822
        %v1825 = vpack.c.bf16 %v1824, %v1824
        %v1826 = vld [vmem:[%s10] sm:$0xf]
        %v1827 = vld [vmem:[%s10 + $0x4] sm:$0xf]
        %v1828 = vld [vmem:[%s10 + $0x8] sm:$0xf]
        %v1829 = vld [vmem:[%s10 + $0xc] sm:$0xf]
        %v1830 = vld [vmem:[%s11] sm:$0x1]
        %v1832 = vlaneseq
        %v1833 = vshrl.u32 %v1832, 7
        %v1834 = vsub.s32 0, %v1833
        %v1835 = vrot.slane %v1830, %v1834
        %v1841 = vunpack.c.l.b16 %v1826
        %v1842 = vunpack.c.l.b16 %v1827
        %v1843 = vunpack.c.l.b16 %v1828
        %v1844 = vunpack.c.l.b16 %v1829
        %v1845 = vpack.c.b16 %v1842, %v1841
        %v1846 = vpack.c.b16 %v1844, %v1843
        %v1850 = vsel %vm505, %v1825, 0
        %1852 = vmatprep.subr.bf16.mxu0 0
        %1853 = vmatpush1.bf16.msra.mxu0 %v1845
        %1854 = vmatprep.subr.bf16.mxu0 0
        %1855 = vmatpush1.bf16.msra.mxu0 %v1846
        %1856 = vmatprep.subr.bf16.mxu0 0
        %1857 = vmatpush1.bf16.msra.mxu0 0
        %1858 = vmatprep.subr.bf16.mxu0 0
        %1859 = vmatpush1.bf16.msra.mxu0 0
        %1860 = vmatprep.subr.bf16.mxu0 0
        %1861 = vmatpush1.bf16.msra.mxu0 0
        %1862 = vmatprep.subr.bf16.mxu0 0
        %1863 = vmatpush1.bf16.msra.mxu0 0
        %1864 = vmatprep.subr.bf16.mxu0 0
        %1865 = vmatpush1.bf16.msra.mxu0 0
        %1866 = vmatprep.subr.bf16.mxu0 0
        %1867 = vmatpush1.bf16.msra.mxu0 0
        %1868 = vmatprep.subr.bf16.mxu0 0
        %1869 = vmatpush1.bf16.msra.mxu0 0
        %1870 = vmatprep.subr.bf16.mxu0 0
        %1871 = vmatpush1.bf16.msra.mxu0 0
        %1872 = vmatprep.subr.bf16.mxu0 0
        %1873 = vmatpush1.bf16.msra.mxu0 0
        %1874 = vmatprep.subr.bf16.mxu0 0
        %1875 = vmatpush1.bf16.msra.mxu0 0
        %1876 = vmatprep.subr.bf16.mxu0 0
        %1877 = vmatpush1.bf16.msra.mxu0 0
        %1878 = vmatprep.subr.bf16.mxu0 0
        %1879 = vmatpush1.bf16.msra.mxu0 0
        %1880 = vmatprep.subr.bf16.mxu0 0
        %1881 = vmatpush1.bf16.msra.mxu0 0
        %1882 = vmatprep.subr.bf16.mxu0 0
        %1883 = vmatpush1.bf16.msra.mxu0 0
        %1884 = vmatprep.mubr.bf16.mxu0 0
        %1885 = vmatmul.mubr.bf16.gmra.mrb[0].mxu0 %v1850
        %v1886 = vpop.f32.mrb[0].mxu0
        %v1887 = vadd.f32 %v1835, %v1886
        %v1888 = vpop.f32.mrb[0].mxu0
        %v1889 = vpop.f32.mrb[0].mxu0
        %v1890 = vpop.f32.mrb[0].mxu0
        %1891 = vdwg.mxu0
        %v1892 = vmax.f32 %v1887, 0.0
        %v1893 = vpack.c.bf16 %v1892, %v1892
        %v1894 = vld [vmem:[%s12] sm:$0xf]
        %v1895 = vld [vmem:[%s12 + $0x4] sm:$0xf]
        %v1896 = vld [vmem:[%s12 + $0x8] sm:$0xf]
        %v1897 = vld [vmem:[%s12 + $0xc] sm:$0xf]
        %v1898 = vld [vmem:[%s12 + $0x10] sm:$0xf]
        %v1899 = vld [vmem:[%s12 + $0x14] sm:$0xf]
        %v1900 = vld [vmem:[%s12 + $0x18] sm:$0xf]
        %v1901 = vld [vmem:[%s12 + $0x1c] sm:$0xf]
        %v1902 = vld [vmem:[%s12 + $0x20] sm:$0xf]
        %v1903 = vld [vmem:[%s12 + $0x24] sm:$0xf]
        %v1904 = vld [vmem:[%s12 + $0x28] sm:$0xf]
        %v1905 = vld [vmem:[%s12 + $0x2c] sm:$0xf]
        %v1906 = vld [vmem:[%s12 + $0x30] sm:$0xf]
        %v1907 = vld [vmem:[%s12 + $0x34] sm:$0xf]
        %v1908 = vld [vmem:[%s12 + $0x38] sm:$0xf]
        %v1909 = vld [vmem:[%s12 + $0x3c] sm:$0xf]
        %v1910 = vld [vmem:[%s13] sm:$0x1]
        %v1912 = vlaneseq
        %v1913 = vshrl.u32 %v1912, 7
        %v1914 = vsub.s32 0, %v1913
        %v1915 = vrot.slane %v1910, %v1914
        %v1933 = vunpack.c.l.b16 %v1894
        %v1934 = vunpack.c.l.b16 %v1895
        %v1935 = vunpack.c.l.b16 %v1896
        %v1936 = vunpack.c.l.b16 %v1897
        %v1937 = vunpack.c.l.b16 %v1898
        %v1938 = vunpack.c.l.b16 %v1899
        %v1939 = vunpack.c.l.b16 %v1900
        %v1940 = vunpack.c.l.b16 %v1901
        %v1941 = vunpack.c.l.b16 %v1902
        %v1942 = vunpack.c.l.b16 %v1903
        %v1943 = vunpack.c.l.b16 %v1904
        %v1944 = vunpack.c.l.b16 %v1905
        %v1945 = vunpack.c.l.b16 %v1906
        %v1946 = vunpack.c.l.b16 %v1907
        %v1947 = vunpack.c.l.b16 %v1908
        %v1948 = vunpack.c.l.b16 %v1909
        %v1949 = vpack.c.b16 %v1934, %v1933
        %v1950 = vpack.c.b16 %v1936, %v1935
        %v1951 = vpack.c.b16 %v1938, %v1937
        %v1952 = vpack.c.b16 %v1940, %v1939
        %v1953 = vpack.c.b16 %v1942, %v1941
        %v1954 = vpack.c.b16 %v1944, %v1943
        %v1955 = vpack.c.b16 %v1946, %v1945
        %v1956 = vpack.c.b16 %v1948, %v1947
        %1965 = vmatprep.subr.bf16.mxu0 0
        %1966 = vmatpush1.bf16.msra.mxu0 %v1949
        %1967 = vmatprep.subr.bf16.mxu0 0
        %1968 = vmatpush1.bf16.msra.mxu0 %v1950
        %1969 = vmatprep.subr.bf16.mxu0 0
        %1970 = vmatpush1.bf16.msra.mxu0 %v1951
        %1971 = vmatprep.subr.bf16.mxu0 0
        %1972 = vmatpush1.bf16.msra.mxu0 %v1952
        %1973 = vmatprep.subr.bf16.mxu0 0
        %1974 = vmatpush1.bf16.msra.mxu0 %v1953
        %1975 = vmatprep.subr.bf16.mxu0 0
        %1976 = vmatpush1.bf16.msra.mxu0 %v1954
        %1977 = vmatprep.subr.bf16.mxu0 0
        %1978 = vmatpush1.bf16.msra.mxu0 %v1955
        %1979 = vmatprep.subr.bf16.mxu0 0
        %1980 = vmatpush1.bf16.msra.mxu0 %v1956
        %1981 = vmatprep.subr.bf16.mxu0 0
        %1982 = vmatpush1.bf16.msra.mxu0 0
        %1983 = vmatprep.subr.bf16.mxu0 0
        %1984 = vmatpush1.bf16.msra.mxu0 0
        %1985 = vmatprep.subr.bf16.mxu0 0
        %1986 = vmatpush1.bf16.msra.mxu0 0
        %1987 = vmatprep.subr.bf16.mxu0 0
        %1988 = vmatpush1.bf16.msra.mxu0 0
        %1989 = vmatprep.subr.bf16.mxu0 0
        %1990 = vmatpush1.bf16.msra.mxu0 0
        %1991 = vmatprep.subr.bf16.mxu0 0
        %1992 = vmatpush1.bf16.msra.mxu0 0
        %1993 = vmatprep.subr.bf16.mxu0 0
        %1994 = vmatpush1.bf16.msra.mxu0 0
        %1995 = vmatprep.subr.bf16.mxu0 0
        %1996 = vmatpush1.bf16.msra.mxu0 0
        %1997 = vmatprep.mubr.bf16.mxu0 0
        %1998 = vmatmul.mubr.bf16.gmra.mrb[0].mxu0 %v1893
        %v1999 = vpop.f32.mrb[0].mxu0
        %v2000 = vadd.f32 %v1915, %v1999
        %v2001 = vpop.f32.mrb[0].mxu0
        %v2002 = vpop.f32.mrb[0].mxu0
        %v2003 = vpop.f32.mrb[0].mxu0
        %2004 = vdwg.mxu0
        %v2005 = vadd.f32 %v1795, %v2000
        %2006 = vst.msk [vmem:[%s496] sm:$0xff] %vm505, %v2005
        %s2007 = sand.u32 %s337, 1
        %s2008 = scalar_lea.sflag [#allocation4], %s2007
        %s2009 = sand.u32 %s337, 1
        %s2010 = smul.addr %s2009, 8
        %s2011 = scalar_lea.vmem [#allocation8], %s2010
        // Predicated region
        $region89: #{tpu_custom_call.1} parent=75 // pred_check
          %p2012 = pneg %p347
        $region90: #{tpu_custom_call.1} parent=75 // pred_check_branch
          %2014 = sbr.rel (%p2012) target = $region92
        $region91: #{tpu_custom_call.1} parent=75 // pred_region
          %s2016 = ssub.s32 128, 128
          %2017 = vsyncadd %s2008, %s2016
          %s2018 = smul.addr %s30, 128
          %s2019 = scalar_lea.hbm %s14, %s2018
          %s2021 = sshll.u32 %s2011, 4
          %s2022 = int_to_ptr.vmem [resolvable:$true] %s2021
          %2024 = dma.vmem_to_hbm [thread:$0]  %s2022, 128, %s2019, %s2008
        $region92: #{tpu_custom_call.1} parent=75 // pred_fallthru
          _
      $region76: #{tpu_custom_call.1} parent=5 // pred_fallthru
        _
      %p2025 = scmp.le.s32.totalorder 2, %s25
      // Predicated region
      $region93: #{tpu_custom_call.1} parent=5 // pred_check
        %p2026 = pneg %p2025
      $region94: #{tpu_custom_call.1} parent=5 // pred_check_branch
        %2028 = sbr.rel (%p2026) target = $region96
      $region95: #{tpu_custom_call.1} parent=5 // pred_region
        %s2029 = ssub.s32 %s25, 2
        // Predicated region
        $region97: #{tpu_custom_call.1} parent=95 // pred_check
          %p2030 = pneg %p353
        $region98: #{tpu_custom_call.1} parent=95 // pred_check_branch
          %2032 = sbr.rel (%p2030) target = $region100
        $region99: #{tpu_custom_call.1} parent=95 // pred_region
          %s2033 = sand.u32 %s338, 1
          %s2034 = scalar_lea.sflag [#allocation4], %s2033
          %s2035 = sand.u32 %s338, 1
          %s2036 = smul.addr %s2035, 8
          %s2037 = scalar_lea.vmem [#allocation8], %s2036
          %2038 = dma.done %s2034, 128
        $region100: #{tpu_custom_call.1} parent=95 // pred_fallthru
          _
      $region96: #{tpu_custom_call.1} parent=5 // pred_fallthru
        _
    $region6: #{tpu_custom_call.1} parent=1 // loop_footer
      %s29 = sadd.s32 1, %s25
    $region7: #{tpu_custom_call.1} parent=1 // loop_footer_branch
      %24 = sbr.rel target = $region3
    $region8: #{tpu_custom_call.1} parent=1 // loop_exit
      _
    %2039 = vsyncpa [#allocation3], 1
    %s2040 = scalar_lea.sflag [#allocation3], 1
    %2041 = vsyncpa %s2040, 1
    %2042 = vsyncpa [#allocation6], 1
    %2043 = vsyncpa [#allocation4], 1
    %s2044 = scalar_lea.sflag [#allocation4], 1
    %2045 = vsyncpa %s2044, 1

</llo_original>
